<compile_context>
chip_gen: v7x
topology: tpu7x:2x2x1
jax: 0.10.0
libtpu: 0.0.40
codegen_flags: <defaults>
</compile_context>

<pallas_src>
import jax
import jax.numpy as jnp
from jax.experimental import pallas as pl
from jax.experimental.pallas import tpu as pltpu


# ----------------------------- fused model kernel -----------------------------

def make_fused_lstm_kernel(num_layers, L, Np, H, Dp):
    """Builds the fused kernel body for fixed (num_layers, L, Np, H, Dp)."""

    def kernel(x_ref, lens_ref, wih_ref, whh_ref, b_ref, head_ref,
               o_ref, hseq_scr):
        # x_ref:    (L*Np, Dp)  bf16, time-major padded input
        # lens_ref: (Np, 1)     int32, lengths - 1 (lengths >= 1 assumed)
        # wih_ref:  (Dp + (num_layers-1)*H, 4H) bf16, stacked input-proj weights
        # whh_ref:  (num_layers*H, 4H)          bf16, stacked recurrent weights
        # b_ref:    (num_layers, 4H)            f32, fused b_ih + b_hh
        # head_ref: (H+1, O)                    f32, [W_lin^T ; b_lin]
        # o_ref:    (Np, O)                     f32 output
        # hseq_scr: (L*Np, H)                   f32 inter-layer h sequence

        lens_m1 = lens_ref[...]                              # (Np, 1) int32
        hlast = jnp.zeros((Np, H), jnp.float32)              # vreg-carried

        for layer in range(num_layers):
            is_last = layer == num_layers - 1
            if layer == 0:
                seq = x_ref[...]                             # (L*Np, Dp) bf16
                r0, d_in = 0, Dp
            else:
                seq = hseq_scr[...].astype(jnp.bfloat16)     # (L*Np, H) bf16
                r0, d_in = Dp + (layer - 1) * H, H

            wih = wih_ref[r0:r0 + d_in, :]                   # (d_in, 4H) bf16
            whh = whh_ref[layer * H:(layer + 1) * H, :]      # (H, 4H)   bf16
            bias = b_ref[layer:layer + 1, :]                 # (1, 4H)   f32

            # Hoisted input projection: ONE batched MXU matmul over all L*Np
            # rows (no recurrent dependence); gx stays in vregs (8 vregs here).
            gx = jnp.dot(seq, wih, preferred_element_type=jnp.float32) + bias

            # Recurrent state carried as values -> no per-step VMEM traffic.
            h = jnp.zeros((Np, H), jnp.float32)
            c = jnp.zeros((Np, H), jnp.float32)
            for t in range(L):                               # fully unrolled
                gates = gx[t * Np:(t + 1) * Np, :] + jnp.dot(
                    h.astype(jnp.bfloat16), whh,
                    preferred_element_type=jnp.float32)      # (Np, 4H) f32
                # sigmoid on the full 128-lane slab (i, f, o quarters used),
                # tanh only on the g quarter; all elementwise math in f32.
                sg = jax.nn.sigmoid(gates)
                i_g = sg[:, 0 * H:1 * H]
                f_g = sg[:, 1 * H:2 * H]
                o_g = sg[:, 3 * H:4 * H]
                g_g = jnp.tanh(gates[:, 2 * H:3 * H])
                c = f_g * c + i_g * g_g
                h = o_g * jnp.tanh(c)
                if is_last:
                    # Track h at the last valid timestep per batch row.
                    hlast = jnp.where(t == lens_m1, h, hlast)
                else:
                    # Store is off the recurrence read path (next layer only).
                    hseq_scr[t * Np:(t + 1) * Np, :] = h

        # Linear head on the MXU (tiny, once; f32).
        w_lin = head_ref[:H, :]                              # (H, O)
        b_lin = head_ref[H:H + 1, :]                         # (1, O)
        o_ref[...] = (jnp.dot(hlast, w_lin,
                              preferred_element_type=jnp.float32) + b_lin)

    return kernel


def fused_lstm_forward(x2d, lens_m1, wih_all, whh_all, b_all, head,
                       *, num_layers, L, Np, H, Dp):
    O = head.shape[1]
    kernel = make_fused_lstm_kernel(num_layers, L, Np, H, Dp)

    def full(shape):
        return pl.BlockSpec(shape, lambda i: (0,) * len(shape))

    # NOTE(v7x scaling): if the real batch grows beyond a couple of sublane
    # tiles, split Np over a leading "parallel" grid axis (dual TensorCore)
    # instead of growing the single resident block; irrelevant at Np=8.
    return pl.pallas_call(
        kernel,
        out_shape=jax.ShapeDtypeStruct((Np, O), jnp.float32),
        grid_spec=pltpu.PrefetchScalarGridSpec(
            num_scalar_prefetch=0,
            grid=(1,),                                  # single fused invocation
            in_specs=[
                full(x2d.shape),
                full(lens_m1.shape),
                full(wih_all.shape),
                full(whh_all.shape),
                full(b_all.shape),
                full(head.shape),
            ],
            out_specs=full((Np, O)),
            scratch_shapes=[
                pltpu.VMEM((L * Np, H), jnp.float32),   # inter-layer h sequence
            ],
        ),
        compiler_params=pltpu.CompilerParams(
            dimension_semantics=("arbitrary",),          # sequential recurrence
        ),
    )(x2d, lens_m1, wih_all, whh_all, b_all, head)


# ------------------------------- model wrapper --------------------------------

class BasicLSTMPallas:
    """Forward-pass equivalent of BasicLSTM(bidirectional=False, dropout=0)."""

    def __init__(self, input_dim, rnn_size, output_dim, num_layers, key):
        H = rnn_size
        assert H % 8 == 0, "rnn_size must be a multiple of 8 sublanes"
        self.rnn_size = H
        self.num_layers = num_layers
        self.output_dim = output_dim
        self.input_dim = input_dim
        self.Dp = ((input_dim + 7) // 8) * 8            # sublane-pad feature dim

        k = 1.0 / jnp.sqrt(jnp.float32(H))
        wih_rows, whh_rows, biases, layers_ref = [], [], [], []
        for l in range(num_layers):
            d_in = input_dim if l == 0 else H
            key, k1, k2, k3, k4 = jax.random.split(key, 5)
            w_ih = jax.random.uniform(k1, (4 * H, d_in), jnp.float32, -k, k)
            w_hh = jax.random.uniform(k2, (4 * H, H), jnp.float32, -k, k)
            b_ih = jax.random.uniform(k3, (4 * H,), jnp.float32, -k, k)
            b_hh = jax.random.uniform(k4, (4 * H,), jnp.float32, -k, k)
            # Model weights are the bf16-rounded values (bf16 MXU operands).
            w_ih_t = w_ih.T.astype(jnp.bfloat16)         # (d_in, 4H)
            w_hh_t = w_hh.T.astype(jnp.bfloat16)         # (H, 4H)
            b = (b_ih + b_hh)[None, :]                   # (1, 4H) fused bias, f32
            if l == 0 and self.Dp != d_in:
                wih_rows.append(jnp.pad(w_ih_t, ((0, self.Dp - d_in), (0, 0))))
            else:
                wih_rows.append(w_ih_t)
            whh_rows.append(w_hh_t)
            biases.append(b)
            layers_ref.append((w_ih_t.astype(jnp.float32),
                               w_hh_t.astype(jnp.float32), b))
        # Packed weight slabs -> few DMAs, static in-kernel slicing.
        self.wih_all = jnp.concatenate(wih_rows, axis=0)  # (Dp+(nl-1)H, 4H) bf16
        self.whh_all = jnp.concatenate(whh_rows, axis=0)  # (nl*H, 4H)       bf16
        self.b_all = jnp.concatenate(biases, axis=0)      # (nl, 4H)         f32

        key, k5, k6 = jax.random.split(key, 3)
        kl = 1.0 / jnp.sqrt(jnp.float32(H))
        w_lin = jax.random.uniform(k5, (output_dim, H), jnp.float32, -kl, kl)
        b_lin = jax.random.uniform(k6, (output_dim,), jnp.float32, -kl, kl)
        self.w_lin_t = w_lin.T                            # (H, O) f32
        self.b_lin = b_lin[None, :]                       # (1, O) f32
        self.head = jnp.concatenate([self.w_lin_t, self.b_lin], axis=0)  # (H+1,O)

        self.layers_ref = layers_ref                      # f32 copies for ref
        # TODO(synk): bidirectional=True and inter-layer dropout are not
        # implemented (the reference module defaults are False / 0).

    def __call__(self, x, lengths):
        # x: (N, L, D) float32, lengths: (N,) int32 with lengths >= 1
        N, L, D = x.shape
        Np = ((N + 7) // 8) * 8                           # pad batch to 8 sublanes
        Dp = self.Dp
        # Tiny one-shot prep outside the kernel: time-major + padding + bf16.
        x_t = jnp.transpose(x.astype(jnp.float32), (1, 0, 2))        # (L, N, D)
        x_t = jnp.pad(x_t, ((0, 0), (0, Np - N), (0, Dp - D)))       # (L, Np, Dp)
        x2d = x_t.reshape(L * Np, Dp).astype(jnp.bfloat16)
        lens = jnp.pad(lengths.astype(jnp.int32), (0, Np - N),
                       constant_values=1)
        lens_m1 = (lens - 1).reshape(Np, 1)
        out = fused_lstm_forward(x2d, lens_m1, self.wih_all, self.whh_all,
                                 self.b_all, self.head,
                                 num_layers=self.num_layers, L=L, Np=Np,
                                 H=self.rnn_size, Dp=Dp)
        return out[:N]


# ------------------------------ pure-JAX reference ----------------------------

def reference_forward(model, x, lengths):
    """f32 LSTM recurrence with the model's (bf16-valued) weights."""
    h = x.astype(jnp.float32)                                  # (N, L, D)
    for (w_ih_t, w_hh_t, b) in model.layers_ref:
        N = h.shape[0]
        H = w_hh_t.shape[0]

        def step(carry, x_t):
            hh, cc = carry
            gates = x_t @ w_ih_t + hh @ w_hh_t + b
            i = jax.nn.sigmoid(gates[:, :H])
            f = jax.nn.sigmoid(gates[:, H:2 * H])
            g = jnp.tanh(gates[:, 2 * H:3 * H])
            o = jax.nn.sigmoid(gates[:, 3 * H:])
            cc = f * cc + i * g
            hh = o * jnp.tanh(cc)
            return (hh, cc), hh

        init = (jnp.zeros((N, H), jnp.float32), jnp.zeros((N, H), jnp.float32))
        _, hs = jax.lax.scan(step, init, jnp.transpose(h, (1, 0, 2)))
        h = jnp.transpose(hs, (1, 0, 2))                       # (N, L, H)
    last = h[jnp.arange(h.shape[0]), lengths - 1]              # (N, H)
    return last @ model.w_lin_t + model.b_lin[0]


# ------------------------------------ main ------------------------------------

if __name__ == "__main__":
    N, L, D, H, O, NUM_LAYERS = 4, 8, 16, 32, 8, 2

    key = jax.random.PRNGKey(0)
    key, kx = jax.random.split(key)
    x = jax.random.normal(kx, (N, L, D), jnp.float32)
    lengths = jnp.array([8, 5, 3, 6], dtype=jnp.int32)

    model = BasicLSTMPallas(D, H, O, NUM_LAYERS, key)

    out = jax.block_until_ready(model(x, lengths))
    ref = reference_forward(model, x, lengths)

    assert out.shape == (N, O)
    # Kernel uses bf16 MXU operands (f32 accumulation); reference keeps the
    # recurrence fully in f32 -> tolerance loosened accordingly.
    assert jnp.allclose(out, ref, atol=2e-2, rtol=2e-2), (
        "mismatch vs reference, max abs diff = "
        f"{float(jnp.max(jnp.abs(out - ref)))}")

    print("KERNEL_OK")
</pallas_src>

<mosaic_0001>
module attributes {stable_mosaic.version = 11 : i64} {
  func.func @kernel(%arg0: i32, %arg1: memref<64x16xbf16, #tpu.memory_space<vmem>>, %arg2: memref<8x1xi32, #tpu.memory_space<vmem>>, %arg3: memref<48x128xbf16, #tpu.memory_space<vmem>>, %arg4: memref<64x128xbf16, #tpu.memory_space<vmem>>, %arg5: memref<2x128xf32, #tpu.memory_space<vmem>>, %arg6: memref<33x8xf32, #tpu.memory_space<vmem>>, %arg7: memref<8x8xf32, #tpu.memory_space<vmem>>, %arg8: memref<64x32xf32, #tpu.memory_space<vmem>>) attributes {dimension_semantics = [#tpu.dimension_semantics<arbitrary>], iteration_bounds = array<i64: 1>, scalar_prefetch = 0 : i64, scratch_operands = 1 : i64, tpu.core_type = #tpu.core_type<tc>, window_params = [{pipeline_mode = #tpu.pipeline_mode<synchronous>, transform_indices = @transform_0, window_bounds = array<i64: 64, 16>}, {pipeline_mode = #tpu.pipeline_mode<synchronous>, transform_indices = @transform_1, window_bounds = array<i64: 8, 1>}, {pipeline_mode = #tpu.pipeline_mode<synchronous>, transform_indices = @transform_2, window_bounds = array<i64: 48, 128>}, {pipeline_mode = #tpu.pipeline_mode<synchronous>, transform_indices = @transform_3, window_bounds = array<i64: 64, 128>}, {pipeline_mode = #tpu.pipeline_mode<synchronous>, transform_indices = @transform_4, window_bounds = array<i64: 2, 128>}, {pipeline_mode = #tpu.pipeline_mode<synchronous>, transform_indices = @transform_5, window_bounds = array<i64: 33, 8>}, {pipeline_mode = #tpu.pipeline_mode<synchronous>, transform_indices = @transform_6, window_bounds = array<i64: 8, 8>}]} {
    %c0 = arith.constant 0 : index
    %c0_0 = arith.constant 0 : index
    %0 = vector.load %arg2[%c0, %c0_0] : memref<8x1xi32, #tpu.memory_space<vmem>>, vector<8x1xi32>
    %cst = arith.constant 0.000000e+00 : f32
    %1 = vector.broadcast %cst : f32 to vector<8x32xf32>
    %c0_1 = arith.constant 0 : index
    %c0_2 = arith.constant 0 : index
    %2 = vector.load %arg1[%c0_1, %c0_2] : memref<64x16xbf16, #tpu.memory_space<vmem>>, vector<64x16xbf16>
    %c0_3 = arith.constant 0 : index
    %c0_4 = arith.constant 0 : index
    %3 = vector.load %arg3[%c0_3, %c0_4] : memref<48x128xbf16, #tpu.memory_space<vmem>>, vector<16x128xbf16>
    %c0_5 = arith.constant 0 : index
    %c0_6 = arith.constant 0 : index
    %4 = vector.load %arg4[%c0_5, %c0_6] : memref<64x128xbf16, #tpu.memory_space<vmem>>, vector<32x128xbf16>
    %c0_7 = arith.constant 0 : index
    %c0_8 = arith.constant 0 : index
    %5 = vector.load %arg5[%c0_7, %c0_8] : memref<2x128xf32, #tpu.memory_space<vmem>>, vector<1x128xf32>
    %cst_9 = arith.constant dense<0.000000e+00> : vector<64x128xf32>
    %6 = tpu.matmul %2, %3, %cst_9 {dimension_numbers = #tpu.dot_dimension_numbers<[1], [0], [0], [1], [0, 0, 1, 1], [], []>} : vector<64x16xbf16>, vector<16x128xbf16>, vector<64x128xf32> -> vector<64x128xf32>
    %7 = vector.broadcast %5 : vector<1x128xf32> to vector<64x128xf32>
    %8 = arith.addf %6, %7 : vector<64x128xf32>
    %cst_10 = arith.constant 0.000000e+00 : f32
    %9 = vector.broadcast %cst_10 : f32 to vector<8x32xf32>
    %cst_11 = arith.constant 0.000000e+00 : f32
    %10 = vector.broadcast %cst_11 : f32 to vector<8x32xf32>
    %11 = vector.extract_strided_slice %8 {offsets = [0, 0], sizes = [8, 128], strides = [1, 1]} : vector<64x128xf32> to vector<8x128xf32>
    %12 = arith.truncf %9 : vector<8x32xf32> to vector<8x32xbf16>
    %cst_12 = arith.constant dense<0.000000e+00> : vector<8x128xf32>
    %13 = tpu.matmul %12, %4, %cst_12 {dimension_numbers = #tpu.dot_dimension_numbers<[1], [0], [0], [1], [0, 0, 1, 1], [], []>} : vector<8x32xbf16>, vector<32x128xbf16>, vector<8x128xf32> -> vector<8x128xf32>
    %14 = arith.addf %11, %13 : vector<8x128xf32>
    %15 = arith.negf %14 : vector<8x128xf32>
    %16 = math.exp %15 : vector<8x128xf32>
    %cst_13 = arith.constant 1.000000e+00 : f32
    %17 = vector.broadcast %cst_13 : f32 to vector<8x128xf32>
    %18 = arith.addf %17, %16 : vector<8x128xf32>
    %19 = arith.divf %17, %18 : vector<8x128xf32>
    %20 = vector.extract_strided_slice %19 {offsets = [0, 0], sizes = [8, 32], strides = [1, 1]} : vector<8x128xf32> to vector<8x32xf32>
    %21 = vector.extract_strided_slice %19 {offsets = [0, 32], sizes = [8, 32], strides = [1, 1]} : vector<8x128xf32> to vector<8x32xf32>
    %22 = vector.extract_strided_slice %19 {offsets = [0, 96], sizes = [8, 32], strides = [1, 1]} : vector<8x128xf32> to vector<8x32xf32>
    %23 = vector.extract_strided_slice %14 {offsets = [0, 64], sizes = [8, 32], strides = [1, 1]} : vector<8x128xf32> to vector<8x32xf32>
    %24 = math.tanh %23 : vector<8x32xf32>
    %25 = arith.mulf %21, %10 : vector<8x32xf32>
    %26 = arith.mulf %20, %24 : vector<8x32xf32>
    %27 = arith.addf %25, %26 : vector<8x32xf32>
    %28 = math.tanh %27 : vector<8x32xf32>
    %29 = arith.mulf %22, %28 : vector<8x32xf32>
    %c0_14 = arith.constant 0 : index
    %c0_15 = arith.constant 0 : index
    %30 = vector.load %arg8[%c0_14, %c0_15] : memref<64x32xf32, #tpu.memory_space<vmem>>, vector<8x32xf32>
    tpu.vector_store %arg8[%c0_14, %c0_15], %29 {strides = array<i32>} : memref<64x32xf32, #tpu.memory_space<vmem>>, vector<8x32xf32>,
    %31 = vector.extract_strided_slice %8 {offsets = [8, 0], sizes = [8, 128], strides = [1, 1]} : vector<64x128xf32> to vector<8x128xf32>
    %32 = arith.truncf %29 : vector<8x32xf32> to vector<8x32xbf16>
    %cst_16 = arith.constant dense<0.000000e+00> : vector<8x128xf32>
    %33 = tpu.matmul %32, %4, %cst_16 {dimension_numbers = #tpu.dot_dimension_numbers<[1], [0], [0], [1], [0, 0, 1, 1], [], []>} : vector<8x32xbf16>, vector<32x128xbf16>, vector<8x128xf32> -> vector<8x128xf32>
    %34 = arith.addf %31, %33 : vector<8x128xf32>
    %35 = arith.negf %34 : vector<8x128xf32>
    %36 = math.exp %35 : vector<8x128xf32>
    %cst_17 = arith.constant 1.000000e+00 : f32
    %37 = vector.broadcast %cst_17 : f32 to vector<8x128xf32>
    %38 = arith.addf %37, %36 : vector<8x128xf32>
    %39 = arith.divf %37, %38 : vector<8x128xf32>
    %40 = vector.extract_strided_slice %39 {offsets = [0, 0], sizes = [8, 32], strides = [1, 1]} : vector<8x128xf32> to vector<8x32xf32>
    %41 = vector.extract_strided_slice %39 {offsets = [0, 32], sizes = [8, 32], strides = [1, 1]} : vector<8x128xf32> to vector<8x32xf32>
    %42 = vector.extract_strided_slice %39 {offsets = [0, 96], sizes = [8, 32], strides = [1, 1]} : vector<8x128xf32> to vector<8x32xf32>
    %43 = vector.extract_strided_slice %34 {offsets = [0, 64], sizes = [8, 32], strides = [1, 1]} : vector<8x128xf32> to vector<8x32xf32>
    %44 = math.tanh %43 : vector<8x32xf32>
    %45 = arith.mulf %41, %27 : vector<8x32xf32>
    %46 = arith.mulf %40, %44 : vector<8x32xf32>
    %47 = arith.addf %45, %46 : vector<8x32xf32>
    %48 = math.tanh %47 : vector<8x32xf32>
    %49 = arith.mulf %42, %48 : vector<8x32xf32>
    %c8 = arith.constant 8 : index
    %c0_18 = arith.constant 0 : index
    %50 = vector.load %arg8[%c8, %c0_18] : memref<64x32xf32, #tpu.memory_space<vmem>>, vector<8x32xf32>
    tpu.vector_store %arg8[%c8, %c0_18], %49 {strides = array<i32>} : memref<64x32xf32, #tpu.memory_space<vmem>>, vector<8x32xf32>,
    %51 = vector.extract_strided_slice %8 {offsets = [16, 0], sizes = [8, 128], strides = [1, 1]} : vector<64x128xf32> to vector<8x128xf32>
    %52 = arith.truncf %49 : vector<8x32xf32> to vector<8x32xbf16>
    %cst_19 = arith.constant dense<0.000000e+00> : vector<8x128xf32>
    %53 = tpu.matmul %52, %4, %cst_19 {dimension_numbers = #tpu.dot_dimension_numbers<[1], [0], [0], [1], [0, 0, 1, 1], [], []>} : vector<8x32xbf16>, vector<32x128xbf16>, vector<8x128xf32> -> vector<8x128xf32>
    %54 = arith.addf %51, %53 : vector<8x128xf32>
    %55 = arith.negf %54 : vector<8x128xf32>
    %56 = math.exp %55 : vector<8x128xf32>
    %cst_20 = arith.constant 1.000000e+00 : f32
    %57 = vector.broadcast %cst_20 : f32 to vector<8x128xf32>
    %58 = arith.addf %57, %56 : vector<8x128xf32>
    %59 = arith.divf %57, %58 : vector<8x128xf32>
    %60 = vector.extract_strided_slice %59 {offsets = [0, 0], sizes = [8, 32], strides = [1, 1]} : vector<8x128xf32> to vector<8x32xf32>
    %61 = vector.extract_strided_slice %59 {offsets = [0, 32], sizes = [8, 32], strides = [1, 1]} : vector<8x128xf32> to vector<8x32xf32>
    %62 = vector.extract_strided_slice %59 {offsets = [0, 96], sizes = [8, 32], strides = [1, 1]} : vector<8x128xf32> to vector<8x32xf32>
    %63 = vector.extract_strided_slice %54 {offsets = [0, 64], sizes = [8, 32], strides = [1, 1]} : vector<8x128xf32> to vector<8x32xf32>
    %64 = math.tanh %63 : vector<8x32xf32>
    %65 = arith.mulf %61, %47 : vector<8x32xf32>
    %66 = arith.mulf %60, %64 : vector<8x32xf32>
    %67 = arith.addf %65, %66 : vector<8x32xf32>
    %68 = math.tanh %67 : vector<8x32xf32>
    %69 = arith.mulf %62, %68 : vector<8x32xf32>
    %c16 = arith.constant 16 : index
    %c0_21 = arith.constant 0 : index
    %70 = vector.load %arg8[%c16, %c0_21] : memref<64x32xf32, #tpu.memory_space<vmem>>, vector<8x32xf32>
    tpu.vector_store %arg8[%c16, %c0_21], %69 {strides = array<i32>} : memref<64x32xf32, #tpu.memory_space<vmem>>, vector<8x32xf32>,
    %71 = vector.extract_strided_slice %8 {offsets = [24, 0], sizes = [8, 128], strides = [1, 1]} : vector<64x128xf32> to vector<8x128xf32>
    %72 = arith.truncf %69 : vector<8x32xf32> to vector<8x32xbf16>
    %cst_22 = arith.constant dense<0.000000e+00> : vector<8x128xf32>
    %73 = tpu.matmul %72, %4, %cst_22 {dimension_numbers = #tpu.dot_dimension_numbers<[1], [0], [0], [1], [0, 0, 1, 1], [], []>} : vector<8x32xbf16>, vector<32x128xbf16>, vector<8x128xf32> -> vector<8x128xf32>
    %74 = arith.addf %71, %73 : vector<8x128xf32>
    %75 = arith.negf %74 : vector<8x128xf32>
    %76 = math.exp %75 : vector<8x128xf32>
    %cst_23 = arith.constant 1.000000e+00 : f32
    %77 = vector.broadcast %cst_23 : f32 to vector<8x128xf32>
    %78 = arith.addf %77, %76 : vector<8x128xf32>
    %79 = arith.divf %77, %78 : vector<8x128xf32>
    %80 = vector.extract_strided_slice %79 {offsets = [0, 0], sizes = [8, 32], strides = [1, 1]} : vector<8x128xf32> to vector<8x32xf32>
    %81 = vector.extract_strided_slice %79 {offsets = [0, 32], sizes = [8, 32], strides = [1, 1]} : vector<8x128xf32> to vector<8x32xf32>
    %82 = vector.extract_strided_slice %79 {offsets = [0, 96], sizes = [8, 32], strides = [1, 1]} : vector<8x128xf32> to vector<8x32xf32>
    %83 = vector.extract_strided_slice %74 {offsets = [0, 64], sizes = [8, 32], strides = [1, 1]} : vector<8x128xf32> to vector<8x32xf32>
    %84 = math.tanh %83 : vector<8x32xf32>
    %85 = arith.mulf %81, %67 : vector<8x32xf32>
    %86 = arith.mulf %80, %84 : vector<8x32xf32>
    %87 = arith.addf %85, %86 : vector<8x32xf32>
    %88 = math.tanh %87 : vector<8x32xf32>
    %89 = arith.mulf %82, %88 : vector<8x32xf32>
    %c24 = arith.constant 24 : index
    %c0_24 = arith.constant 0 : index
    %90 = vector.load %arg8[%c24, %c0_24] : memref<64x32xf32, #tpu.memory_space<vmem>>, vector<8x32xf32>
    tpu.vector_store %arg8[%c24, %c0_24], %89 {strides = array<i32>} : memref<64x32xf32, #tpu.memory_space<vmem>>, vector<8x32xf32>,
    %91 = vector.extract_strided_slice %8 {offsets = [32, 0], sizes = [8, 128], strides = [1, 1]} : vector<64x128xf32> to vector<8x128xf32>
    %92 = arith.truncf %89 : vector<8x32xf32> to vector<8x32xbf16>
    %cst_25 = arith.constant dense<0.000000e+00> : vector<8x128xf32>
    %93 = tpu.matmul %92, %4, %cst_25 {dimension_numbers = #tpu.dot_dimension_numbers<[1], [0], [0], [1], [0, 0, 1, 1], [], []>} : vector<8x32xbf16>, vector<32x128xbf16>, vector<8x128xf32> -> vector<8x128xf32>
    %94 = arith.addf %91, %93 : vector<8x128xf32>
    %95 = arith.negf %94 : vector<8x128xf32>
    %96 = math.exp %95 : vector<8x128xf32>
    %cst_26 = arith.constant 1.000000e+00 : f32
    %97 = vector.broadcast %cst_26 : f32 to vector<8x128xf32>
    %98 = arith.addf %97, %96 : vector<8x128xf32>
    %99 = arith.divf %97, %98 : vector<8x128xf32>
    %100 = vector.extract_strided_slice %99 {offsets = [0, 0], sizes = [8, 32], strides = [1, 1]} : vector<8x128xf32> to vector<8x32xf32>
    %101 = vector.extract_strided_slice %99 {offsets = [0, 32], sizes = [8, 32], strides = [1, 1]} : vector<8x128xf32> to vector<8x32xf32>
    %102 = vector.extract_strided_slice %99 {offsets = [0, 96], sizes = [8, 32], strides = [1, 1]} : vector<8x128xf32> to vector<8x32xf32>
    %103 = vector.extract_strided_slice %94 {offsets = [0, 64], sizes = [8, 32], strides = [1, 1]} : vector<8x128xf32> to vector<8x32xf32>
    %104 = math.tanh %103 : vector<8x32xf32>
    %105 = arith.mulf %101, %87 : vector<8x32xf32>
    %106 = arith.mulf %100, %104 : vector<8x32xf32>
    %107 = arith.addf %105, %106 : vector<8x32xf32>
    %108 = math.tanh %107 : vector<8x32xf32>
    %109 = arith.mulf %102, %108 : vector<8x32xf32>
    %c32 = arith.constant 32 : index
    %c0_27 = arith.constant 0 : index
    %110 = vector.load %arg8[%c32, %c0_27] : memref<64x32xf32, #tpu.memory_space<vmem>>, vector<8x32xf32>
    tpu.vector_store %arg8[%c32, %c0_27], %109 {strides = array<i32>} : memref<64x32xf32, #tpu.memory_space<vmem>>, vector<8x32xf32>,
    %111 = vector.extract_strided_slice %8 {offsets = [40, 0], sizes = [8, 128], strides = [1, 1]} : vector<64x128xf32> to vector<8x128xf32>
    %112 = arith.truncf %109 : vector<8x32xf32> to vector<8x32xbf16>
    %cst_28 = arith.constant dense<0.000000e+00> : vector<8x128xf32>
    %113 = tpu.matmul %112, %4, %cst_28 {dimension_numbers = #tpu.dot_dimension_numbers<[1], [0], [0], [1], [0, 0, 1, 1], [], []>} : vector<8x32xbf16>, vector<32x128xbf16>, vector<8x128xf32> -> vector<8x128xf32>
    %114 = arith.addf %111, %113 : vector<8x128xf32>
    %115 = arith.negf %114 : vector<8x128xf32>
    %116 = math.exp %115 : vector<8x128xf32>
    %cst_29 = arith.constant 1.000000e+00 : f32
    %117 = vector.broadcast %cst_29 : f32 to vector<8x128xf32>
    %118 = arith.addf %117, %116 : vector<8x128xf32>
    %119 = arith.divf %117, %118 : vector<8x128xf32>
    %120 = vector.extract_strided_slice %119 {offsets = [0, 0], sizes = [8, 32], strides = [1, 1]} : vector<8x128xf32> to vector<8x32xf32>
    %121 = vector.extract_strided_slice %119 {offsets = [0, 32], sizes = [8, 32], strides = [1, 1]} : vector<8x128xf32> to vector<8x32xf32>
    %122 = vector.extract_strided_slice %119 {offsets = [0, 96], sizes = [8, 32], strides = [1, 1]} : vector<8x128xf32> to vector<8x32xf32>
    %123 = vector.extract_strided_slice %114 {offsets = [0, 64], sizes = [8, 32], strides = [1, 1]} : vector<8x128xf32> to vector<8x32xf32>
    %124 = math.tanh %123 : vector<8x32xf32>
    %125 = arith.mulf %121, %107 : vector<8x32xf32>
    %126 = arith.mulf %120, %124 : vector<8x32xf32>
    %127 = arith.addf %125, %126 : vector<8x32xf32>
    %128 = math.tanh %127 : vector<8x32xf32>
    %129 = arith.mulf %122, %128 : vector<8x32xf32>
    %c40 = arith.constant 40 : index
    %c0_30 = arith.constant 0 : index
    %130 = vector.load %arg8[%c40, %c0_30] : memref<64x32xf32, #tpu.memory_space<vmem>>, vector<8x32xf32>
    tpu.vector_store %arg8[%c40, %c0_30], %129 {strides = array<i32>} : memref<64x32xf32, #tpu.memory_space<vmem>>, vector<8x32xf32>,
    %131 = vector.extract_strided_slice %8 {offsets = [48, 0], sizes = [8, 128], strides = [1, 1]} : vector<64x128xf32> to vector<8x128xf32>
    %132 = arith.truncf %129 : vector<8x32xf32> to vector<8x32xbf16>
    %cst_31 = arith.constant dense<0.000000e+00> : vector<8x128xf32>
    %133 = tpu.matmul %132, %4, %cst_31 {dimension_numbers = #tpu.dot_dimension_numbers<[1], [0], [0], [1], [0, 0, 1, 1], [], []>} : vector<8x32xbf16>, vector<32x128xbf16>, vector<8x128xf32> -> vector<8x128xf32>
    %134 = arith.addf %131, %133 : vector<8x128xf32>
    %135 = arith.negf %134 : vector<8x128xf32>
    %136 = math.exp %135 : vector<8x128xf32>
    %cst_32 = arith.constant 1.000000e+00 : f32
    %137 = vector.broadcast %cst_32 : f32 to vector<8x128xf32>
    %138 = arith.addf %137, %136 : vector<8x128xf32>
    %139 = arith.divf %137, %138 : vector<8x128xf32>
    %140 = vector.extract_strided_slice %139 {offsets = [0, 0], sizes = [8, 32], strides = [1, 1]} : vector<8x128xf32> to vector<8x32xf32>
    %141 = vector.extract_strided_slice %139 {offsets = [0, 32], sizes = [8, 32], strides = [1, 1]} : vector<8x128xf32> to vector<8x32xf32>
    %142 = vector.extract_strided_slice %139 {offsets = [0, 96], sizes = [8, 32], strides = [1, 1]} : vector<8x128xf32> to vector<8x32xf32>
    %143 = vector.extract_strided_slice %134 {offsets = [0, 64], sizes = [8, 32], strides = [1, 1]} : vector<8x128xf32> to vector<8x32xf32>
    %144 = math.tanh %143 : vector<8x32xf32>
    %145 = arith.mulf %141, %127 : vector<8x32xf32>
    %146 = arith.mulf %140, %144 : vector<8x32xf32>
    %147 = arith.addf %145, %146 : vector<8x32xf32>
    %148 = math.tanh %147 : vector<8x32xf32>
    %149 = arith.mulf %142, %148 : vector<8x32xf32>
    %c48 = arith.constant 48 : index
    %c0_33 = arith.constant 0 : index
    %150 = vector.load %arg8[%c48, %c0_33] : memref<64x32xf32, #tpu.memory_space<vmem>>, vector<8x32xf32>
    tpu.vector_store %arg8[%c48, %c0_33], %149 {strides = array<i32>} : memref<64x32xf32, #tpu.memory_space<vmem>>, vector<8x32xf32>,
    %151 = vector.extract_strided_slice %8 {offsets = [56, 0], sizes = [8, 128], strides = [1, 1]} : vector<64x128xf32> to vector<8x128xf32>
    %152 = arith.truncf %149 : vector<8x32xf32> to vector<8x32xbf16>
    %cst_34 = arith.constant dense<0.000000e+00> : vector<8x128xf32>
    %153 = tpu.matmul %152, %4, %cst_34 {dimension_numbers = #tpu.dot_dimension_numbers<[1], [0], [0], [1], [0, 0, 1, 1], [], []>} : vector<8x32xbf16>, vector<32x128xbf16>, vector<8x128xf32> -> vector<8x128xf32>
    %154 = arith.addf %151, %153 : vector<8x128xf32>
    %155 = arith.negf %154 : vector<8x128xf32>
    %156 = math.exp %155 : vector<8x128xf32>
    %cst_35 = arith.constant 1.000000e+00 : f32
    %157 = vector.broadcast %cst_35 : f32 to vector<8x128xf32>
    %158 = arith.addf %157, %156 : vector<8x128xf32>
    %159 = arith.divf %157, %158 : vector<8x128xf32>
    %160 = vector.extract_strided_slice %159 {offsets = [0, 0], sizes = [8, 32], strides = [1, 1]} : vector<8x128xf32> to vector<8x32xf32>
    %161 = vector.extract_strided_slice %159 {offsets = [0, 32], sizes = [8, 32], strides = [1, 1]} : vector<8x128xf32> to vector<8x32xf32>
    %162 = vector.extract_strided_slice %159 {offsets = [0, 96], sizes = [8, 32], strides = [1, 1]} : vector<8x128xf32> to vector<8x32xf32>
    %163 = vector.extract_strided_slice %154 {offsets = [0, 64], sizes = [8, 32], strides = [1, 1]} : vector<8x128xf32> to vector<8x32xf32>
    %164 = math.tanh %163 : vector<8x32xf32>
    %165 = arith.mulf %161, %147 : vector<8x32xf32>
    %166 = arith.mulf %160, %164 : vector<8x32xf32>
    %167 = arith.addf %165, %166 : vector<8x32xf32>
    %168 = math.tanh %167 : vector<8x32xf32>
    %169 = arith.mulf %162, %168 : vector<8x32xf32>
    %c56 = arith.constant 56 : index
    %c0_36 = arith.constant 0 : index
    %170 = vector.load %arg8[%c56, %c0_36] : memref<64x32xf32, #tpu.memory_space<vmem>>, vector<8x32xf32>
    tpu.vector_store %arg8[%c56, %c0_36], %169 {strides = array<i32>} : memref<64x32xf32, #tpu.memory_space<vmem>>, vector<8x32xf32>,
    %c0_37 = arith.constant 0 : index
    %c0_38 = arith.constant 0 : index
    %171 = vector.load %arg8[%c0_37, %c0_38] : memref<64x32xf32, #tpu.memory_space<vmem>>, vector<64x32xf32>
    %172 = arith.truncf %171 : vector<64x32xf32> to vector<64x32xbf16>
    %c16_39 = arith.constant 16 : index
    %c0_40 = arith.constant 0 : index
    %173 = vector.load %arg3[%c16_39, %c0_40] : memref<48x128xbf16, #tpu.memory_space<vmem>>, vector<32x128xbf16>
    %c32_41 = arith.constant 32 : index
    %c0_42 = arith.constant 0 : index
    %174 = vector.load %arg4[%c32_41, %c0_42] : memref<64x128xbf16, #tpu.memory_space<vmem>>, vector<32x128xbf16>
    %c1 = arith.constant 1 : index
    %c0_43 = arith.constant 0 : index
    %175 = vector.load %arg5[%c1, %c0_43] : memref<2x128xf32, #tpu.memory_space<vmem>>, vector<1x128xf32>
    %cst_44 = arith.constant dense<0.000000e+00> : vector<64x128xf32>
    %176 = tpu.matmul %172, %173, %cst_44 {dimension_numbers = #tpu.dot_dimension_numbers<[1], [0], [0], [1], [0, 0, 1, 1], [], []>} : vector<64x32xbf16>, vector<32x128xbf16>, vector<64x128xf32> -> vector<64x128xf32>
    %177 = vector.broadcast %175 : vector<1x128xf32> to vector<64x128xf32>
    %178 = arith.addf %176, %177 : vector<64x128xf32>
    %cst_45 = arith.constant 0.000000e+00 : f32
    %179 = vector.broadcast %cst_45 : f32 to vector<8x32xf32>
    %cst_46 = arith.constant 0.000000e+00 : f32
    %180 = vector.broadcast %cst_46 : f32 to vector<8x32xf32>
    %181 = vector.extract_strided_slice %178 {offsets = [0, 0], sizes = [8, 128], strides = [1, 1]} : vector<64x128xf32> to vector<8x128xf32>
    %182 = arith.truncf %179 : vector<8x32xf32> to vector<8x32xbf16>
    %cst_47 = arith.constant dense<0.000000e+00> : vector<8x128xf32>
    %183 = tpu.matmul %182, %174, %cst_47 {dimension_numbers = #tpu.dot_dimension_numbers<[1], [0], [0], [1], [0, 0, 1, 1], [], []>} : vector<8x32xbf16>, vector<32x128xbf16>, vector<8x128xf32> -> vector<8x128xf32>
    %184 = arith.addf %181, %183 : vector<8x128xf32>
    %185 = arith.negf %184 : vector<8x128xf32>
    %186 = math.exp %185 : vector<8x128xf32>
    %cst_48 = arith.constant 1.000000e+00 : f32
    %187 = vector.broadcast %cst_48 : f32 to vector<8x128xf32>
    %188 = arith.addf %187, %186 : vector<8x128xf32>
    %189 = arith.divf %187, %188 : vector<8x128xf32>
    %190 = vector.extract_strided_slice %189 {offsets = [0, 0], sizes = [8, 32], strides = [1, 1]} : vector<8x128xf32> to vector<8x32xf32>
    %191 = vector.extract_strided_slice %189 {offsets = [0, 32], sizes = [8, 32], strides = [1, 1]} : vector<8x128xf32> to vector<8x32xf32>
    %192 = vector.extract_strided_slice %189 {offsets = [0, 96], sizes = [8, 32], strides = [1, 1]} : vector<8x128xf32> to vector<8x32xf32>
    %193 = vector.extract_strided_slice %184 {offsets = [0, 64], sizes = [8, 32], strides = [1, 1]} : vector<8x128xf32> to vector<8x32xf32>
    %194 = math.tanh %193 : vector<8x32xf32>
    %195 = arith.mulf %191, %180 : vector<8x32xf32>
    %196 = arith.mulf %190, %194 : vector<8x32xf32>
    %197 = arith.addf %195, %196 : vector<8x32xf32>
    %198 = math.tanh %197 : vector<8x32xf32>
    %199 = arith.mulf %192, %198 : vector<8x32xf32>
    %c0_i32 = arith.constant 0 : i32
    %200 = vector.broadcast %c0_i32 : i32 to vector<8x1xi32>
    %201 = arith.cmpi eq, %0, %200 : vector<8x1xi32>
    %202 = vector.shape_cast %201 : vector<8x1xi1> to vector<8x1xi1>
    %203 = vector.broadcast %202 : vector<8x1xi1> to vector<8x32xi1>
    %204 = arith.select %203, %199, %1 : vector<8x32xi1>, vector<8x32xf32>
    %205 = vector.extract_strided_slice %178 {offsets = [8, 0], sizes = [8, 128], strides = [1, 1]} : vector<64x128xf32> to vector<8x128xf32>
    %206 = arith.truncf %199 : vector<8x32xf32> to vector<8x32xbf16>
    %cst_49 = arith.constant dense<0.000000e+00> : vector<8x128xf32>
    %207 = tpu.matmul %206, %174, %cst_49 {dimension_numbers = #tpu.dot_dimension_numbers<[1], [0], [0], [1], [0, 0, 1, 1], [], []>} : vector<8x32xbf16>, vector<32x128xbf16>, vector<8x128xf32> -> vector<8x128xf32>
    %208 = arith.addf %205, %207 : vector<8x128xf32>
    %209 = arith.negf %208 : vector<8x128xf32>
    %210 = math.exp %209 : vector<8x128xf32>
    %cst_50 = arith.constant 1.000000e+00 : f32
    %211 = vector.broadcast %cst_50 : f32 to vector<8x128xf32>
    %212 = arith.addf %211, %210 : vector<8x128xf32>
    %213 = arith.divf %211, %212 : vector<8x128xf32>
    %214 = vector.extract_strided_slice %213 {offsets = [0, 0], sizes = [8, 32], strides = [1, 1]} : vector<8x128xf32> to vector<8x32xf32>
    %215 = vector.extract_strided_slice %213 {offsets = [0, 32], sizes = [8, 32], strides = [1, 1]} : vector<8x128xf32> to vector<8x32xf32>
    %216 = vector.extract_strided_slice %213 {offsets = [0, 96], sizes = [8, 32], strides = [1, 1]} : vector<8x128xf32> to vector<8x32xf32>
    %217 = vector.extract_strided_slice %208 {offsets = [0, 64], sizes = [8, 32], strides = [1, 1]} : vector<8x128xf32> to vector<8x32xf32>
    %218 = math.tanh %217 : vector<8x32xf32>
    %219 = arith.mulf %215, %197 : vector<8x32xf32>
    %220 = arith.mulf %214, %218 : vector<8x32xf32>
    %221 = arith.addf %219, %220 : vector<8x32xf32>
    %222 = math.tanh %221 : vector<8x32xf32>
    %223 = arith.mulf %216, %222 : vector<8x32xf32>
    %c1_i32 = arith.constant 1 : i32
    %224 = vector.broadcast %c1_i32 : i32 to vector<8x1xi32>
    %225 = arith.cmpi eq, %0, %224 : vector<8x1xi32>
    %226 = vector.shape_cast %225 : vector<8x1xi1> to vector<8x1xi1>
    %227 = vector.broadcast %226 : vector<8x1xi1> to vector<8x32xi1>
    %228 = arith.select %227, %223, %204 : vector<8x32xi1>, vector<8x32xf32>
    %229 = vector.extract_strided_slice %178 {offsets = [16, 0], sizes = [8, 128], strides = [1, 1]} : vector<64x128xf32> to vector<8x128xf32>
    %230 = arith.truncf %223 : vector<8x32xf32> to vector<8x32xbf16>
    %cst_51 = arith.constant dense<0.000000e+00> : vector<8x128xf32>
    %231 = tpu.matmul %230, %174, %cst_51 {dimension_numbers = #tpu.dot_dimension_numbers<[1], [0], [0], [1], [0, 0, 1, 1], [], []>} : vector<8x32xbf16>, vector<32x128xbf16>, vector<8x128xf32> -> vector<8x128xf32>
    %232 = arith.addf %229, %231 : vector<8x128xf32>
    %233 = arith.negf %232 : vector<8x128xf32>
    %234 = math.exp %233 : vector<8x128xf32>
    %cst_52 = arith.constant 1.000000e+00 : f32
    %235 = vector.broadcast %cst_52 : f32 to vector<8x128xf32>
    %236 = arith.addf %235, %234 : vector<8x128xf32>
    %237 = arith.divf %235, %236 : vector<8x128xf32>
    %238 = vector.extract_strided_slice %237 {offsets = [0, 0], sizes = [8, 32], strides = [1, 1]} : vector<8x128xf32> to vector<8x32xf32>
    %239 = vector.extract_strided_slice %237 {offsets = [0, 32], sizes = [8, 32], strides = [1, 1]} : vector<8x128xf32> to vector<8x32xf32>
    %240 = vector.extract_strided_slice %237 {offsets = [0, 96], sizes = [8, 32], strides = [1, 1]} : vector<8x128xf32> to vector<8x32xf32>
    %241 = vector.extract_strided_slice %232 {offsets = [0, 64], sizes = [8, 32], strides = [1, 1]} : vector<8x128xf32> to vector<8x32xf32>
    %242 = math.tanh %241 : vector<8x32xf32>
    %243 = arith.mulf %239, %221 : vector<8x32xf32>
    %244 = arith.mulf %238, %242 : vector<8x32xf32>
    %245 = arith.addf %243, %244 : vector<8x32xf32>
    %246 = math.tanh %245 : vector<8x32xf32>
    %247 = arith.mulf %240, %246 : vector<8x32xf32>
    %c2_i32 = arith.constant 2 : i32
    %248 = vector.broadcast %c2_i32 : i32 to vector<8x1xi32>
    %249 = arith.cmpi eq, %0, %248 : vector<8x1xi32>
    %250 = vector.shape_cast %249 : vector<8x1xi1> to vector<8x1xi1>
    %251 = vector.broadcast %250 : vector<8x1xi1> to vector<8x32xi1>
    %252 = arith.select %251, %247, %228 : vector<8x32xi1>, vector<8x32xf32>
    %253 = vector.extract_strided_slice %178 {offsets = [24, 0], sizes = [8, 128], strides = [1, 1]} : vector<64x128xf32> to vector<8x128xf32>
    %254 = arith.truncf %247 : vector<8x32xf32> to vector<8x32xbf16>
    %cst_53 = arith.constant dense<0.000000e+00> : vector<8x128xf32>
    %255 = tpu.matmul %254, %174, %cst_53 {dimension_numbers = #tpu.dot_dimension_numbers<[1], [0], [0], [1], [0, 0, 1, 1], [], []>} : vector<8x32xbf16>, vector<32x128xbf16>, vector<8x128xf32> -> vector<8x128xf32>
    %256 = arith.addf %253, %255 : vector<8x128xf32>
    %257 = arith.negf %256 : vector<8x128xf32>
    %258 = math.exp %257 : vector<8x128xf32>
    %cst_54 = arith.constant 1.000000e+00 : f32
    %259 = vector.broadcast %cst_54 : f32 to vector<8x128xf32>
    %260 = arith.addf %259, %258 : vector<8x128xf32>
    %261 = arith.divf %259, %260 : vector<8x128xf32>
    %262 = vector.extract_strided_slice %261 {offsets = [0, 0], sizes = [8, 32], strides = [1, 1]} : vector<8x128xf32> to vector<8x32xf32>
    %263 = vector.extract_strided_slice %261 {offsets = [0, 32], sizes = [8, 32], strides = [1, 1]} : vector<8x128xf32> to vector<8x32xf32>
    %264 = vector.extract_strided_slice %261 {offsets = [0, 96], sizes = [8, 32], strides = [1, 1]} : vector<8x128xf32> to vector<8x32xf32>
    %265 = vector.extract_strided_slice %256 {offsets = [0, 64], sizes = [8, 32], strides = [1, 1]} : vector<8x128xf32> to vector<8x32xf32>
    %266 = math.tanh %265 : vector<8x32xf32>
    %267 = arith.mulf %263, %245 : vector<8x32xf32>
    %268 = arith.mulf %262, %266 : vector<8x32xf32>
    %269 = arith.addf %267, %268 : vector<8x32xf32>
    %270 = math.tanh %269 : vector<8x32xf32>
    %271 = arith.mulf %264, %270 : vector<8x32xf32>
    %c3_i32 = arith.constant 3 : i32
    %272 = vector.broadcast %c3_i32 : i32 to vector<8x1xi32>
    %273 = arith.cmpi eq, %0, %272 : vector<8x1xi32>
    %274 = vector.shape_cast %273 : vector<8x1xi1> to vector<8x1xi1>
    %275 = vector.broadcast %274 : vector<8x1xi1> to vector<8x32xi1>
    %276 = arith.select %275, %271, %252 : vector<8x32xi1>, vector<8x32xf32>
    %277 = vector.extract_strided_slice %178 {offsets = [32, 0], sizes = [8, 128], strides = [1, 1]} : vector<64x128xf32> to vector<8x128xf32>
    %278 = arith.truncf %271 : vector<8x32xf32> to vector<8x32xbf16>
    %cst_55 = arith.constant dense<0.000000e+00> : vector<8x128xf32>
    %279 = tpu.matmul %278, %174, %cst_55 {dimension_numbers = #tpu.dot_dimension_numbers<[1], [0], [0], [1], [0, 0, 1, 1], [], []>} : vector<8x32xbf16>, vector<32x128xbf16>, vector<8x128xf32> -> vector<8x128xf32>
    %280 = arith.addf %277, %279 : vector<8x128xf32>
    %281 = arith.negf %280 : vector<8x128xf32>
    %282 = math.exp %281 : vector<8x128xf32>
    %cst_56 = arith.constant 1.000000e+00 : f32
    %283 = vector.broadcast %cst_56 : f32 to vector<8x128xf32>
    %284 = arith.addf %283, %282 : vector<8x128xf32>
    %285 = arith.divf %283, %284 : vector<8x128xf32>
    %286 = vector.extract_strided_slice %285 {offsets = [0, 0], sizes = [8, 32], strides = [1, 1]} : vector<8x128xf32> to vector<8x32xf32>
    %287 = vector.extract_strided_slice %285 {offsets = [0, 32], sizes = [8, 32], strides = [1, 1]} : vector<8x128xf32> to vector<8x32xf32>
    %288 = vector.extract_strided_slice %285 {offsets = [0, 96], sizes = [8, 32], strides = [1, 1]} : vector<8x128xf32> to vector<8x32xf32>
    %289 = vector.extract_strided_slice %280 {offsets = [0, 64], sizes = [8, 32], strides = [1, 1]} : vector<8x128xf32> to vector<8x32xf32>
    %290 = math.tanh %289 : vector<8x32xf32>
    %291 = arith.mulf %287, %269 : vector<8x32xf32>
    %292 = arith.mulf %286, %290 : vector<8x32xf32>
    %293 = arith.addf %291, %292 : vector<8x32xf32>
    %294 = math.tanh %293 : vector<8x32xf32>
    %295 = arith.mulf %288, %294 : vector<8x32xf32>
    %c4_i32 = arith.constant 4 : i32
    %296 = vector.broadcast %c4_i32 : i32 to vector<8x1xi32>
    %297 = arith.cmpi eq, %0, %296 : vector<8x1xi32>
    %298 = vector.shape_cast %297 : vector<8x1xi1> to vector<8x1xi1>
    %299 = vector.broadcast %298 : vector<8x1xi1> to vector<8x32xi1>
    %300 = arith.select %299, %295, %276 : vector<8x32xi1>, vector<8x32xf32>
    %301 = vector.extract_strided_slice %178 {offsets = [40, 0], sizes = [8, 128], strides = [1, 1]} : vector<64x128xf32> to vector<8x128xf32>
    %302 = arith.truncf %295 : vector<8x32xf32> to vector<8x32xbf16>
    %cst_57 = arith.constant dense<0.000000e+00> : vector<8x128xf32>
    %303 = tpu.matmul %302, %174, %cst_57 {dimension_numbers = #tpu.dot_dimension_numbers<[1], [0], [0], [1], [0, 0, 1, 1], [], []>} : vector<8x32xbf16>, vector<32x128xbf16>, vector<8x128xf32> -> vector<8x128xf32>
    %304 = arith.addf %301, %303 : vector<8x128xf32>
    %305 = arith.negf %304 : vector<8x128xf32>
    %306 = math.exp %305 : vector<8x128xf32>
    %cst_58 = arith.constant 1.000000e+00 : f32
    %307 = vector.broadcast %cst_58 : f32 to vector<8x128xf32>
    %308 = arith.addf %307, %306 : vector<8x128xf32>
    %309 = arith.divf %307, %308 : vector<8x128xf32>
    %310 = vector.extract_strided_slice %309 {offsets = [0, 0], sizes = [8, 32], strides = [1, 1]} : vector<8x128xf32> to vector<8x32xf32>
    %311 = vector.extract_strided_slice %309 {offsets = [0, 32], sizes = [8, 32], strides = [1, 1]} : vector<8x128xf32> to vector<8x32xf32>
    %312 = vector.extract_strided_slice %309 {offsets = [0, 96], sizes = [8, 32], strides = [1, 1]} : vector<8x128xf32> to vector<8x32xf32>
    %313 = vector.extract_strided_slice %304 {offsets = [0, 64], sizes = [8, 32], strides = [1, 1]} : vector<8x128xf32> to vector<8x32xf32>
    %314 = math.tanh %313 : vector<8x32xf32>
    %315 = arith.mulf %311, %293 : vector<8x32xf32>
    %316 = arith.mulf %310, %314 : vector<8x32xf32>
    %317 = arith.addf %315, %316 : vector<8x32xf32>
    %318 = math.tanh %317 : vector<8x32xf32>
    %319 = arith.mulf %312, %318 : vector<8x32xf32>
    %c5_i32 = arith.constant 5 : i32
    %320 = vector.broadcast %c5_i32 : i32 to vector<8x1xi32>
    %321 = arith.cmpi eq, %0, %320 : vector<8x1xi32>
    %322 = vector.shape_cast %321 : vector<8x1xi1> to vector<8x1xi1>
    %323 = vector.broadcast %322 : vector<8x1xi1> to vector<8x32xi1>
    %324 = arith.select %323, %319, %300 : vector<8x32xi1>, vector<8x32xf32>
    %325 = vector.extract_strided_slice %178 {offsets = [48, 0], sizes = [8, 128], strides = [1, 1]} : vector<64x128xf32> to vector<8x128xf32>
    %326 = arith.truncf %319 : vector<8x32xf32> to vector<8x32xbf16>
    %cst_59 = arith.constant dense<0.000000e+00> : vector<8x128xf32>
    %327 = tpu.matmul %326, %174, %cst_59 {dimension_numbers = #tpu.dot_dimension_numbers<[1], [0], [0], [1], [0, 0, 1, 1], [], []>} : vector<8x32xbf16>, vector<32x128xbf16>, vector<8x128xf32> -> vector<8x128xf32>
    %328 = arith.addf %325, %327 : vector<8x128xf32>
    %329 = arith.negf %328 : vector<8x128xf32>
    %330 = math.exp %329 : vector<8x128xf32>
    %cst_60 = arith.constant 1.000000e+00 : f32
    %331 = vector.broadcast %cst_60 : f32 to vector<8x128xf32>
    %332 = arith.addf %331, %330 : vector<8x128xf32>
    %333 = arith.divf %331, %332 : vector<8x128xf32>
    %334 = vector.extract_strided_slice %333 {offsets = [0, 0], sizes = [8, 32], strides = [1, 1]} : vector<8x128xf32> to vector<8x32xf32>
    %335 = vector.extract_strided_slice %333 {offsets = [0, 32], sizes = [8, 32], strides = [1, 1]} : vector<8x128xf32> to vector<8x32xf32>
    %336 = vector.extract_strided_slice %333 {offsets = [0, 96], sizes = [8, 32], strides = [1, 1]} : vector<8x128xf32> to vector<8x32xf32>
    %337 = vector.extract_strided_slice %328 {offsets = [0, 64], sizes = [8, 32], strides = [1, 1]} : vector<8x128xf32> to vector<8x32xf32>
    %338 = math.tanh %337 : vector<8x32xf32>
    %339 = arith.mulf %335, %317 : vector<8x32xf32>
    %340 = arith.mulf %334, %338 : vector<8x32xf32>
    %341 = arith.addf %339, %340 : vector<8x32xf32>
    %342 = math.tanh %341 : vector<8x32xf32>
    %343 = arith.mulf %336, %342 : vector<8x32xf32>
    %c6_i32 = arith.constant 6 : i32
    %344 = vector.broadcast %c6_i32 : i32 to vector<8x1xi32>
    %345 = arith.cmpi eq, %0, %344 : vector<8x1xi32>
    %346 = vector.shape_cast %345 : vector<8x1xi1> to vector<8x1xi1>
    %347 = vector.broadcast %346 : vector<8x1xi1> to vector<8x32xi1>
    %348 = arith.select %347, %343, %324 : vector<8x32xi1>, vector<8x32xf32>
    %349 = vector.extract_strided_slice %178 {offsets = [56, 0], sizes = [8, 128], strides = [1, 1]} : vector<64x128xf32> to vector<8x128xf32>
    %350 = arith.truncf %343 : vector<8x32xf32> to vector<8x32xbf16>
    %cst_61 = arith.constant dense<0.000000e+00> : vector<8x128xf32>
    %351 = tpu.matmul %350, %174, %cst_61 {dimension_numbers = #tpu.dot_dimension_numbers<[1], [0], [0], [1], [0, 0, 1, 1], [], []>} : vector<8x32xbf16>, vector<32x128xbf16>, vector<8x128xf32> -> vector<8x128xf32>
    %352 = arith.addf %349, %351 : vector<8x128xf32>
    %353 = arith.negf %352 : vector<8x128xf32>
    %354 = math.exp %353 : vector<8x128xf32>
    %cst_62 = arith.constant 1.000000e+00 : f32
    %355 = vector.broadcast %cst_62 : f32 to vector<8x128xf32>
    %356 = arith.addf %355, %354 : vector<8x128xf32>
    %357 = arith.divf %355, %356 : vector<8x128xf32>
    %358 = vector.extract_strided_slice %357 {offsets = [0, 0], sizes = [8, 32], strides = [1, 1]} : vector<8x128xf32> to vector<8x32xf32>
    %359 = vector.extract_strided_slice %357 {offsets = [0, 32], sizes = [8, 32], strides = [1, 1]} : vector<8x128xf32> to vector<8x32xf32>
    %360 = vector.extract_strided_slice %357 {offsets = [0, 96], sizes = [8, 32], strides = [1, 1]} : vector<8x128xf32> to vector<8x32xf32>
    %361 = vector.extract_strided_slice %352 {offsets = [0, 64], sizes = [8, 32], strides = [1, 1]} : vector<8x128xf32> to vector<8x32xf32>
    %362 = math.tanh %361 : vector<8x32xf32>
    %363 = arith.mulf %359, %341 : vector<8x32xf32>
    %364 = arith.mulf %358, %362 : vector<8x32xf32>
    %365 = arith.addf %363, %364 : vector<8x32xf32>
    %366 = math.tanh %365 : vector<8x32xf32>
    %367 = arith.mulf %360, %366 : vector<8x32xf32>
    %c7_i32 = arith.constant 7 : i32
    %368 = vector.broadcast %c7_i32 : i32 to vector<8x1xi32>
    %369 = arith.cmpi eq, %0, %368 : vector<8x1xi32>
    %370 = vector.shape_cast %369 : vector<8x1xi1> to vector<8x1xi1>
    %371 = vector.broadcast %370 : vector<8x1xi1> to vector<8x32xi1>
    %372 = arith.select %371, %367, %348 : vector<8x32xi1>, vector<8x32xf32>
    %c0_63 = arith.constant 0 : index
    %c0_64 = arith.constant 0 : index
    %373 = vector.load %arg6[%c0_63, %c0_64] : memref<33x8xf32, #tpu.memory_space<vmem>>, vector<32x8xf32>
    %c32_65 = arith.constant 32 : index
    %c0_66 = arith.constant 0 : index
    %374 = vector.load %arg6[%c32_65, %c0_66] : memref<33x8xf32, #tpu.memory_space<vmem>>, vector<1x8xf32>
    %cst_67 = arith.constant dense<0.000000e+00> : vector<8x8xf32>
    %375 = tpu.matmul %372, %373, %cst_67 {dimension_numbers = #tpu.dot_dimension_numbers<[1], [0], [0], [1], [0, 0, 1, 1], [], []>} : vector<8x32xf32>, vector<32x8xf32>, vector<8x8xf32> -> vector<8x8xf32>
    %376 = vector.broadcast %374 : vector<1x8xf32> to vector<8x8xf32>
    %377 = arith.addf %375, %376 : vector<8x8xf32>
    %c0_68 = arith.constant 0 : index
    %c0_69 = arith.constant 0 : index
    %378 = vector.load %arg7[%c0_68, %c0_69] : memref<8x8xf32, #tpu.memory_space<vmem>>, vector<8x8xf32>
    tpu.vector_store %arg7[%c0_68, %c0_69], %377 {strides = array<i32>} : memref<8x8xf32, #tpu.memory_space<vmem>>, vector<8x8xf32>,
    return
  }
  func.func @transform_0(%arg0: i32) -> (i32, i32) {
    %c0_i32 = arith.constant 0 : i32
    %c0_i32_0 = arith.constant 0 : i32
    %c0_i32_1 = arith.constant 0 : i32
    return %c0_i32, %c0_i32_0 : i32, i32
  }
  func.func @transform_1(%arg0: i32) -> (i32, i32) {
    %c0_i32 = arith.constant 0 : i32
    %c0_i32_0 = arith.constant 0 : i32
    %c0_i32_1 = arith.constant 0 : i32
    return %c0_i32, %c0_i32_0 : i32, i32
  }
  func.func @transform_2(%arg0: i32) -> (i32, i32) {
    %c0_i32 = arith.constant 0 : i32
    %c0_i32_0 = arith.constant 0 : i32
    %c0_i32_1 = arith.constant 0 : i32
    return %c0_i32, %c0_i32_0 : i32, i32
  }
  func.func @transform_3(%arg0: i32) -> (i32, i32) {
    %c0_i32 = arith.constant 0 : i32
    %c0_i32_0 = arith.constant 0 : i32
    %c0_i32_1 = arith.constant 0 : i32
    return %c0_i32, %c0_i32_0 : i32, i32
  }
  func.func @transform_4(%arg0: i32) -> (i32, i32) {
    %c0_i32 = arith.constant 0 : i32
    %c0_i32_0 = arith.constant 0 : i32
    %c0_i32_1 = arith.constant 0 : i32
    return %c0_i32, %c0_i32_0 : i32, i32
  }
  func.func @transform_5(%arg0: i32) -> (i32, i32) {
    %c0_i32 = arith.constant 0 : i32
    %c0_i32_0 = arith.constant 0 : i32
    %c0_i32_1 = arith.constant 0 : i32
    return %c0_i32, %c0_i32_0 : i32, i32
  }
  func.func @transform_6(%arg0: i32) -> (i32, i32) {
    %c0_i32 = arith.constant 0 : i32
    %c0_i32_0 = arith.constant 0 : i32
    %c0_i32_1 = arith.constant 0 : i32
    return %c0_i32, %c0_i32_0 : i32, i32
  }
}

</mosaic_0001>

<llo_original>
// kernel: tpu_custom_call.1
$region0: #{tpu_custom_call.1}
  #allocation0 [shape = 'u32[]', space=smem, size = 0x4, offset = 0x4, fixed_abs, tag = 'smem constant byte address 0x4 - core index']
  #allocation1 [shape = 'u32[144,128]{1,0:T(1,128)}', space=vmem, size = 0x12000, scoped, tag = 'internal scratch']
  #allocation2 [shape = 'f32[64,32]{1,0:T(8,128)}', space=vmem, size = 0x8000, scoped, tag = 'scratch operand']
  %s0 = inlined_call_operand.vmem [shape: bf16[64,16], index: 0, kind: input, shape index: {}]
  %s1 = inlined_call_operand.vmem [shape: s32[8,1], index: 1, kind: input, shape index: {}]
  %s2 = inlined_call_operand.vmem [shape: bf16[48,128], index: 2, kind: input, shape index: {}]
  %s3 = inlined_call_operand.vmem [shape: bf16[64,128], index: 3, kind: input, shape index: {}]
  %s4 = inlined_call_operand.vmem [shape: f32[2,128], index: 4, kind: input, shape index: {}]
  %s5 = inlined_call_operand.vmem [shape: f32[33,8], index: 5, kind: input, shape index: {}]
  %s6 = inlined_call_operand.hbm [shape: f32[8,8], index: 6, kind: output, shape index: {}]
  %s7 = sld [smem:[#allocation0]]
  $region34: #{tpu_custom_call.1} parent=0
    _
  %s9 = ssub.s32 1, %s7
  %s10 = scalar_select 0, %s9, %s7
  $region1: #{tpu_custom_call.1} parent=0
    #allocation3 [shape = 'u8[4096]{0}', space=vmem, size = 0x1000, scoped, tag = 'output window, operand 0, single buffered']
    #allocation4 [shape = 's32[1]{0}', space=sflag, size = 0x4, scoped, tag = 'scoped memory for tpu_custom_call.1']
    %11 = vsyncpa [#allocation4], 0
    // Predicated region
    $region2: #{tpu_custom_call.1} parent=1 // pred_check
      _
    $region3: #{tpu_custom_call.1} parent=1 // pred_check_branch
      %13 = sbr.rel (0) target = $region5
    $region4: #{tpu_custom_call.1} parent=1 // pred_region
      _
    $region5: #{tpu_custom_call.1} parent=1 // pred_fallthru
      _
    // Predicated region
    $region6: #{tpu_custom_call.1} parent=1 // pred_check
      _
    $region7: #{tpu_custom_call.1} parent=1 // pred_check_branch
      %15 = sbr.rel (0) target = $region9
    $region8: #{tpu_custom_call.1} parent=1 // pred_region
      _
    $region9: #{tpu_custom_call.1} parent=1 // pred_fallthru
      _
    // Predicated region
    $region10: #{tpu_custom_call.1} parent=1 // pred_check
      _
    $region11: #{tpu_custom_call.1} parent=1 // pred_check_branch
      %17 = sbr.rel (0) target = $region13
    $region12: #{tpu_custom_call.1} parent=1 // pred_region
      _
    $region13: #{tpu_custom_call.1} parent=1 // pred_fallthru
      _
    // Predicated region
    $region14: #{tpu_custom_call.1} parent=1 // pred_check
      _
    $region15: #{tpu_custom_call.1} parent=1 // pred_check_branch
      %19 = sbr.rel (0) target = $region17
    $region16: #{tpu_custom_call.1} parent=1 // pred_region
      _
    $region17: #{tpu_custom_call.1} parent=1 // pred_fallthru
      _
    // Predicated region
    $region18: #{tpu_custom_call.1} parent=1 // pred_check
      _
    $region19: #{tpu_custom_call.1} parent=1 // pred_check_branch
      %21 = sbr.rel (0) target = $region21
    $region20: #{tpu_custom_call.1} parent=1 // pred_region
      _
    $region21: #{tpu_custom_call.1} parent=1 // pred_fallthru
      _
    // Predicated region
    $region22: #{tpu_custom_call.1} parent=1 // pred_check
      _
    $region23: #{tpu_custom_call.1} parent=1 // pred_check_branch
      %23 = sbr.rel (0) target = $region25
    $region24: #{tpu_custom_call.1} parent=1 // pred_region
      _
    $region25: #{tpu_custom_call.1} parent=1 // pred_fallthru
      _
    %v25 = vld [vmem:[%s1] sm:$0xff]
    %v26 = vld [vmem:[%s0] sm:$0xf]
    %v27 = vld [vmem:[%s0 + $0x4] sm:$0xf]
    %v28 = vld [vmem:[%s0 + $0x8] sm:$0xf]
    %v29 = vld [vmem:[%s0 + $0xc] sm:$0xf]
    %v30 = vld [vmem:[%s0 + $0x10] sm:$0xf]
    %v31 = vld [vmem:[%s0 + $0x14] sm:$0xf]
    %v32 = vld [vmem:[%s0 + $0x18] sm:$0xf]
    %v33 = vld [vmem:[%s0 + $0x1c] sm:$0xf]
    %v34 = vld [vmem:[%s2] sm:$0xf]
    %v35 = vld [vmem:[%s2 + $0x4] sm:$0xf]
    %v36 = vld [vmem:[%s3] sm:$0xf]
    %v37 = vld [vmem:[%s3 + $0x4] sm:$0xf]
    %v38 = vld [vmem:[%s3 + $0x8] sm:$0xf]
    %v39 = vld [vmem:[%s3 + $0xc] sm:$0xf]
    %v40 = vld [vmem:[%s4] sm:$0x1]
    %v41 = vlaneseq
    %v42 = vshrl.u32 %v41, 7
    %v43 = vsub.s32 0, %v42
    %v44 = vrot.slane %v40, %v43
    %v53 = vunpack.c.l.b16 %v26
    %v54 = vunpack.c.l.b16 %v27
    %v55 = vunpack.c.l.b16 %v28
    %v56 = vunpack.c.l.b16 %v29
    %v57 = vunpack.c.l.b16 %v30
    %v58 = vunpack.c.l.b16 %v31
    %v59 = vunpack.c.l.b16 %v32
    %v60 = vunpack.c.l.b16 %v33
    %v61 = vpack.c.b16 %v54, %v53
    %v62 = vpack.c.b16 %v56, %v55
    %v63 = vpack.c.b16 %v58, %v57
    %v64 = vpack.c.b16 %v60, %v59
    %v67 = vunpack.c.l.b16 %v34
    %v68 = vunpack.c.l.b16 %v35
    %v69 = vpack.c.b16 %v68, %v67
    %vm71 = vcmask 130048
    %v73 = vsel %vm71, %v61, 0
    %v76 = vsel %vm71, %v62, 0
    %v79 = vsel %vm71, %v63, 0
    %v82 = vsel %vm71, %v64, 0
    %84 = vmatprep.subr.bf16.mxu0 0
    %85 = vmatpush1.bf16.msra.mxu0 %v69
    %86 = vmatprep.subr.bf16.mxu0 0
    %87 = vmatpush1.bf16.msra.mxu0 0
    %88 = vmatprep.subr.bf16.mxu0 0
    %89 = vmatpush1.bf16.msra.mxu0 0
    %90 = vmatprep.subr.bf16.mxu0 0
    %91 = vmatpush1.bf16.msra.mxu0 0
    %92 = vmatprep.subr.bf16.mxu0 0
    %93 = vmatpush1.bf16.msra.mxu0 0
    %94 = vmatprep.subr.bf16.mxu0 0
    %95 = vmatpush1.bf16.msra.mxu0 0
    %96 = vmatprep.subr.bf16.mxu0 0
    %97 = vmatpush1.bf16.msra.mxu0 0
    %98 = vmatprep.subr.bf16.mxu0 0
    %99 = vmatpush1.bf16.msra.mxu0 0
    %100 = vmatprep.subr.bf16.mxu0 0
    %101 = vmatpush1.bf16.msra.mxu0 0
    %102 = vmatprep.subr.bf16.mxu0 0
    %103 = vmatpush1.bf16.msra.mxu0 0
    %104 = vmatprep.subr.bf16.mxu0 0
    %105 = vmatpush1.bf16.msra.mxu0 0
    %106 = vmatprep.subr.bf16.mxu0 0
    %107 = vmatpush1.bf16.msra.mxu0 0
    %108 = vmatprep.subr.bf16.mxu0 0
    %109 = vmatpush1.bf16.msra.mxu0 0
    %110 = vmatprep.subr.bf16.mxu0 0
    %111 = vmatpush1.bf16.msra.mxu0 0
    %112 = vmatprep.subr.bf16.mxu0 0
    %113 = vmatpush1.bf16.msra.mxu0 0
    %114 = vmatprep.subr.bf16.mxu0 0
    %115 = vmatpush1.bf16.msra.mxu0 0
    %116 = vmatprep.mubr.bf16.mxu0 0
    %117 = vmatmul.mubr.bf16.gmra.mrb[0].mxu0 %v73
    %v118 = vpop.f32.mrb[0].mxu0
    %v119 = vadd.f32 %v44, %v118
    %v120 = vpop.f32.mrb[0].mxu0
    %v121 = vpop.f32.mrb[0].mxu0
    %v122 = vadd.f32 %v44, %v121
    %v123 = vpop.f32.mrb[0].mxu0
    %124 = vmatprep.mubr.bf16.mxu0 0
    %125 = vmatmul.mubr.bf16.gmra.mrb[0].mxu0 %v76
    %v126 = vpop.f32.mrb[0].mxu0
    %v127 = vadd.f32 %v44, %v126
    %v128 = vpop.f32.mrb[0].mxu0
    %v129 = vpop.f32.mrb[0].mxu0
    %v130 = vadd.f32 %v44, %v129
    %v131 = vpop.f32.mrb[0].mxu0
    %132 = vmatprep.mubr.bf16.mxu0 0
    %133 = vmatmul.mubr.bf16.gmra.mrb[0].mxu0 %v79
    %v134 = vpop.f32.mrb[0].mxu0
    %v135 = vadd.f32 %v44, %v134
    %v136 = vpop.f32.mrb[0].mxu0
    %v137 = vpop.f32.mrb[0].mxu0
    %v138 = vadd.f32 %v44, %v137
    %v139 = vpop.f32.mrb[0].mxu0
    %140 = vmatprep.mubr.bf16.mxu0 0
    %141 = vmatmul.mubr.bf16.gmra.mrb[0].mxu0 %v82
    %v142 = vpop.f32.mrb[0].mxu0
    %v143 = vadd.f32 %v44, %v142
    %v144 = vpop.f32.mrb[0].mxu0
    %v145 = vpop.f32.mrb[0].mxu0
    %v146 = vadd.f32 %v44, %v145
    %v147 = vpop.f32.mrb[0].mxu0
    %148 = vdwg.mxu0
    %v153 = vunpack.c.l.b16 %v36
    %v154 = vunpack.c.l.b16 %v37
    %v155 = vunpack.c.l.b16 %v38
    %v156 = vunpack.c.l.b16 %v39
    %v157 = vpack.c.b16 %v154, %v153
    %v158 = vpack.c.b16 %v156, %v155
    %vm161 = vcmask 261120
    %v163 = vsel %vm161, 0, 0
    %165 = vmatprep.subr.bf16.mxu0 0
    %166 = vmatpush1.bf16.msra.mxu0 %v157
    %167 = vmatprep.subr.bf16.mxu0 0
    %168 = vmatpush1.bf16.msra.mxu0 %v158
    %169 = vmatprep.subr.bf16.mxu0 0
    %170 = vmatpush1.bf16.msra.mxu0 0
    %171 = vmatprep.subr.bf16.mxu0 0
    %172 = vmatpush1.bf16.msra.mxu0 0
    %173 = vmatprep.subr.bf16.mxu0 0
    %174 = vmatpush1.bf16.msra.mxu0 0
    %175 = vmatprep.subr.bf16.mxu0 0
    %176 = vmatpush1.bf16.msra.mxu0 0
    %177 = vmatprep.subr.bf16.mxu0 0
    %178 = vmatpush1.bf16.msra.mxu0 0
    %179 = vmatprep.subr.bf16.mxu0 0
    %180 = vmatpush1.bf16.msra.mxu0 0
    %181 = vmatprep.subr.bf16.mxu0 0
    %182 = vmatpush1.bf16.msra.mxu0 0
    %183 = vmatprep.subr.bf16.mxu0 0
    %184 = vmatpush1.bf16.msra.mxu0 0
    %185 = vmatprep.subr.bf16.mxu0 0
    %186 = vmatpush1.bf16.msra.mxu0 0
    %187 = vmatprep.subr.bf16.mxu0 0
    %188 = vmatpush1.bf16.msra.mxu0 0
    %189 = vmatprep.subr.bf16.mxu0 0
    %190 = vmatpush1.bf16.msra.mxu0 0
    %191 = vmatprep.subr.bf16.mxu0 0
    %192 = vmatpush1.bf16.msra.mxu0 0
    %193 = vmatprep.subr.bf16.mxu0 0
    %194 = vmatpush1.bf16.msra.mxu0 0
    %195 = vmatprep.subr.bf16.mxu0 0
    %196 = vmatpush1.bf16.msra.mxu0 0
    %197 = vmatprep.mubr.bf16.mxu0 0
    %198 = vmatmul.mubr.bf16.gmra.mrb[0].mxu0 %v163
    %v199 = vpop.f32.mrb[0].mxu0
    %v200 = vadd.f32 0.0, %v199
    %v201 = vpop.f32.mrb[0].mxu0
    %v202 = vpop.f32.mrb[0].mxu0
    %v203 = vpop.f32.mrb[0].mxu0
    %204 = vdwg.mxu0
    %v205 = vadd.f32 %v119, %v200
    %v206 = vxor.u32 %v205, 2147483648
    %v207 = vmul.f32 %v206, 1.442695
    %v208 = vpow.pop %v207
    %v209 = vadd.f32 %v208, 1.0
    %v210 = vrcp.pop %v209
    %v211 = vmul.f32 1.0, %v210
    %v212 = vtanh.pop %v205
    %v213 = vmul.f32 %v211, 0.0
    %215 = vrot.lane.b32.xlu0 %v212, 64
    %v216 = vpop.permute.xlu0 %215
    %v218 = vmul.f32 %v211, %v216
    %220 = vrot.lane.b32.xlu0 %v218, 32
    %v221 = vpop.permute.xlu0 %220
    %v223 = vadd.f32 %v213, %v221
    %v224 = vtanh.pop %v223
    %226 = vrot.lane.b32.xlu0 %v224, 64
    %v227 = vpop.permute.xlu0 %226
    %v229 = vmul.f32 %v211, %v227
    %231 = vrot.lane.b32.xlu0 %v229, 32
    %v232 = vpop.permute.xlu0 %231
    %234 = vst.msk [vmem:[#allocation2] sm:$0xff] %vm161, %v232
    %v235 = vpack.c.bf16 %v229, %v229
    %237 = vrot.lane.b32.xlu0 %v235, 32
    %v238 = vpop.permute.xlu0 %237
    %v240 = vsel %vm161, %v238, 0
    %242 = vmatprep.subr.bf16.mxu0 0
    %243 = vmatpush1.bf16.msra.mxu0 %v157
    %244 = vmatprep.subr.bf16.mxu0 0
    %245 = vmatpush1.bf16.msra.mxu0 %v158
    %246 = vmatprep.subr.bf16.mxu0 0
    %247 = vmatpush1.bf16.msra.mxu0 0
    %248 = vmatprep.subr.bf16.mxu0 0
    %249 = vmatpush1.bf16.msra.mxu0 0
    %250 = vmatprep.subr.bf16.mxu0 0
    %251 = vmatpush1.bf16.msra.mxu0 0
    %252 = vmatprep.subr.bf16.mxu0 0
    %253 = vmatpush1.bf16.msra.mxu0 0
    %254 = vmatprep.subr.bf16.mxu0 0
    %255 = vmatpush1.bf16.msra.mxu0 0
    %256 = vmatprep.subr.bf16.mxu0 0
    %257 = vmatpush1.bf16.msra.mxu0 0
    %258 = vmatprep.subr.bf16.mxu0 0
    %259 = vmatpush1.bf16.msra.mxu0 0
    %260 = vmatprep.subr.bf16.mxu0 0
    %261 = vmatpush1.bf16.msra.mxu0 0
    %262 = vmatprep.subr.bf16.mxu0 0
    %263 = vmatpush1.bf16.msra.mxu0 0
    %264 = vmatprep.subr.bf16.mxu0 0
    %265 = vmatpush1.bf16.msra.mxu0 0
    %266 = vmatprep.subr.bf16.mxu0 0
    %267 = vmatpush1.bf16.msra.mxu0 0
    %268 = vmatprep.subr.bf16.mxu0 0
    %269 = vmatpush1.bf16.msra.mxu0 0
    %270 = vmatprep.subr.bf16.mxu0 0
    %271 = vmatpush1.bf16.msra.mxu0 0
    %272 = vmatprep.subr.bf16.mxu0 0
    %273 = vmatpush1.bf16.msra.mxu0 0
    %274 = vmatprep.mubr.bf16.mxu0 0
    %275 = vmatmul.mubr.bf16.gmra.mrb[0].mxu0 %v240
    %v276 = vpop.f32.mrb[0].mxu0
    %v277 = vadd.f32 0.0, %v276
    %v278 = vpop.f32.mrb[0].mxu0
    %v279 = vpop.f32.mrb[0].mxu0
    %v280 = vpop.f32.mrb[0].mxu0
    %281 = vdwg.mxu0
    %v282 = vadd.f32 %v122, %v277
    %v283 = vxor.u32 %v282, 2147483648
    %v284 = vmul.f32 %v283, 1.442695
    %v285 = vpow.pop %v284
    %v286 = vadd.f32 %v285, 1.0
    %v287 = vrcp.pop %v286
    %v288 = vmul.f32 1.0, %v287
    %v289 = vtanh.pop %v282
    %v290 = vmul.f32 %v288, %v223
    %292 = vrot.lane.b32.xlu0 %v289, 64
    %v293 = vpop.permute.xlu0 %292
    %v295 = vmul.f32 %v288, %v293
    %297 = vrot.lane.b32.xlu0 %v295, 32
    %v298 = vpop.permute.xlu0 %297
    %v300 = vadd.f32 %v290, %v298
    %v301 = vtanh.pop %v300
    %303 = vrot.lane.b32.xlu0 %v301, 64
    %v304 = vpop.permute.xlu0 %303
    %v306 = vmul.f32 %v288, %v304
    %308 = vrot.lane.b32.xlu0 %v306, 32
    %v309 = vpop.permute.xlu0 %308
    %311 = vst.msk [vmem:[#allocation2 + $0x8] sm:$0xff] %vm161, %v309
    %v312 = vpack.c.bf16 %v306, %v306
    %314 = vrot.lane.b32.xlu0 %v312, 32
    %v315 = vpop.permute.xlu0 %314
    %v317 = vsel %vm161, %v315, 0
    %319 = vmatprep.subr.bf16.mxu0 0
    %320 = vmatpush1.bf16.msra.mxu0 %v157
    %321 = vmatprep.subr.bf16.mxu0 0
    %322 = vmatpush1.bf16.msra.mxu0 %v158
    %323 = vmatprep.subr.bf16.mxu0 0
    %324 = vmatpush1.bf16.msra.mxu0 0
    %325 = vmatprep.subr.bf16.mxu0 0
    %326 = vmatpush1.bf16.msra.mxu0 0
    %327 = vmatprep.subr.bf16.mxu0 0
    %328 = vmatpush1.bf16.msra.mxu0 0
    %329 = vmatprep.subr.bf16.mxu0 0
    %330 = vmatpush1.bf16.msra.mxu0 0
    %331 = vmatprep.subr.bf16.mxu0 0
    %332 = vmatpush1.bf16.msra.mxu0 0
    %333 = vmatprep.subr.bf16.mxu0 0
    %334 = vmatpush1.bf16.msra.mxu0 0
    %335 = vmatprep.subr.bf16.mxu0 0
    %336 = vmatpush1.bf16.msra.mxu0 0
    %337 = vmatprep.subr.bf16.mxu0 0
    %338 = vmatpush1.bf16.msra.mxu0 0
    %339 = vmatprep.subr.bf16.mxu0 0
    %340 = vmatpush1.bf16.msra.mxu0 0
    %341 = vmatprep.subr.bf16.mxu0 0
    %342 = vmatpush1.bf16.msra.mxu0 0
    %343 = vmatprep.subr.bf16.mxu0 0
    %344 = vmatpush1.bf16.msra.mxu0 0
    %345 = vmatprep.subr.bf16.mxu0 0
    %346 = vmatpush1.bf16.msra.mxu0 0
    %347 = vmatprep.subr.bf16.mxu0 0
    %348 = vmatpush1.bf16.msra.mxu0 0
    %349 = vmatprep.subr.bf16.mxu0 0
    %350 = vmatpush1.bf16.msra.mxu0 0
    %351 = vmatprep.mubr.bf16.mxu0 0
    %352 = vmatmul.mubr.bf16.gmra.mrb[0].mxu0 %v317
    %v353 = vpop.f32.mrb[0].mxu0
    %v354 = vadd.f32 0.0, %v353
    %v355 = vpop.f32.mrb[0].mxu0
    %v356 = vpop.f32.mrb[0].mxu0
    %v357 = vpop.f32.mrb[0].mxu0
    %358 = vdwg.mxu0
    %v359 = vadd.f32 %v127, %v354
    %v360 = vxor.u32 %v359, 2147483648
    %v361 = vmul.f32 %v360, 1.442695
    %v362 = vpow.pop %v361
    %v363 = vadd.f32 %v362, 1.0
    %v364 = vrcp.pop %v363
    %v365 = vmul.f32 1.0, %v364
    %v366 = vtanh.pop %v359
    %v367 = vmul.f32 %v365, %v300
    %369 = vrot.lane.b32.xlu0 %v366, 64
    %v370 = vpop.permute.xlu0 %369
    %v372 = vmul.f32 %v365, %v370
    %374 = vrot.lane.b32.xlu0 %v372, 32
    %v375 = vpop.permute.xlu0 %374
    %v377 = vadd.f32 %v367, %v375
    %v378 = vtanh.pop %v377
    %380 = vrot.lane.b32.xlu0 %v378, 64
    %v381 = vpop.permute.xlu0 %380
    %v383 = vmul.f32 %v365, %v381
    %385 = vrot.lane.b32.xlu0 %v383, 32
    %v386 = vpop.permute.xlu0 %385
    %388 = vst.msk [vmem:[#allocation2 + $0x10] sm:$0xff] %vm161, %v386
    %v389 = vpack.c.bf16 %v383, %v383
    %391 = vrot.lane.b32.xlu0 %v389, 32
    %v392 = vpop.permute.xlu0 %391
    %v394 = vsel %vm161, %v392, 0
    %396 = vmatprep.subr.bf16.mxu0 0
    %397 = vmatpush1.bf16.msra.mxu0 %v157
    %398 = vmatprep.subr.bf16.mxu0 0
    %399 = vmatpush1.bf16.msra.mxu0 %v158
    %400 = vmatprep.subr.bf16.mxu0 0
    %401 = vmatpush1.bf16.msra.mxu0 0
    %402 = vmatprep.subr.bf16.mxu0 0
    %403 = vmatpush1.bf16.msra.mxu0 0
    %404 = vmatprep.subr.bf16.mxu0 0
    %405 = vmatpush1.bf16.msra.mxu0 0
    %406 = vmatprep.subr.bf16.mxu0 0
    %407 = vmatpush1.bf16.msra.mxu0 0
    %408 = vmatprep.subr.bf16.mxu0 0
    %409 = vmatpush1.bf16.msra.mxu0 0
    %410 = vmatprep.subr.bf16.mxu0 0
    %411 = vmatpush1.bf16.msra.mxu0 0
    %412 = vmatprep.subr.bf16.mxu0 0
    %413 = vmatpush1.bf16.msra.mxu0 0
    %414 = vmatprep.subr.bf16.mxu0 0
    %415 = vmatpush1.bf16.msra.mxu0 0
    %416 = vmatprep.subr.bf16.mxu0 0
    %417 = vmatpush1.bf16.msra.mxu0 0
    %418 = vmatprep.subr.bf16.mxu0 0
    %419 = vmatpush1.bf16.msra.mxu0 0
    %420 = vmatprep.subr.bf16.mxu0 0
    %421 = vmatpush1.bf16.msra.mxu0 0
    %422 = vmatprep.subr.bf16.mxu0 0
    %423 = vmatpush1.bf16.msra.mxu0 0
    %424 = vmatprep.subr.bf16.mxu0 0
    %425 = vmatpush1.bf16.msra.mxu0 0
    %426 = vmatprep.subr.bf16.mxu0 0
    %427 = vmatpush1.bf16.msra.mxu0 0
    %428 = vmatprep.mubr.bf16.mxu0 0
    %429 = vmatmul.mubr.bf16.gmra.mrb[0].mxu0 %v394
    %v430 = vpop.f32.mrb[0].mxu0
    %v431 = vadd.f32 0.0, %v430
    %v432 = vpop.f32.mrb[0].mxu0
    %v433 = vpop.f32.mrb[0].mxu0
    %v434 = vpop.f32.mrb[0].mxu0
    %435 = vdwg.mxu0
    %v436 = vadd.f32 %v130, %v431
    %v437 = vxor.u32 %v436, 2147483648
    %v438 = vmul.f32 %v437, 1.442695
    %v439 = vpow.pop %v438
    %v440 = vadd.f32 %v439, 1.0
    %v441 = vrcp.pop %v440
    %v442 = vmul.f32 1.0, %v441
    %v443 = vtanh.pop %v436
    %v444 = vmul.f32 %v442, %v377
    %446 = vrot.lane.b32.xlu0 %v443, 64
    %v447 = vpop.permute.xlu0 %446
    %v449 = vmul.f32 %v442, %v447
    %451 = vrot.lane.b32.xlu0 %v449, 32
    %v452 = vpop.permute.xlu0 %451
    %v454 = vadd.f32 %v444, %v452
    %v455 = vtanh.pop %v454
    %457 = vrot.lane.b32.xlu0 %v455, 64
    %v458 = vpop.permute.xlu0 %457
    %v460 = vmul.f32 %v442, %v458
    %462 = vrot.lane.b32.xlu0 %v460, 32
    %v463 = vpop.permute.xlu0 %462
    %465 = vst.msk [vmem:[#allocation2 + $0x18] sm:$0xff] %vm161, %v463
    %v466 = vpack.c.bf16 %v460, %v460
    %468 = vrot.lane.b32.xlu0 %v466, 32
    %v469 = vpop.permute.xlu0 %468
    %v471 = vsel %vm161, %v469, 0
    %473 = vmatprep.subr.bf16.mxu0 0
    %474 = vmatpush1.bf16.msra.mxu0 %v157
    %475 = vmatprep.subr.bf16.mxu0 0
    %476 = vmatpush1.bf16.msra.mxu0 %v158
    %477 = vmatprep.subr.bf16.mxu0 0
    %478 = vmatpush1.bf16.msra.mxu0 0
    %479 = vmatprep.subr.bf16.mxu0 0
    %480 = vmatpush1.bf16.msra.mxu0 0
    %481 = vmatprep.subr.bf16.mxu0 0
    %482 = vmatpush1.bf16.msra.mxu0 0
    %483 = vmatprep.subr.bf16.mxu0 0
    %484 = vmatpush1.bf16.msra.mxu0 0
    %485 = vmatprep.subr.bf16.mxu0 0
    %486 = vmatpush1.bf16.msra.mxu0 0
    %487 = vmatprep.subr.bf16.mxu0 0
    %488 = vmatpush1.bf16.msra.mxu0 0
    %489 = vmatprep.subr.bf16.mxu0 0
    %490 = vmatpush1.bf16.msra.mxu0 0
    %491 = vmatprep.subr.bf16.mxu0 0
    %492 = vmatpush1.bf16.msra.mxu0 0
    %493 = vmatprep.subr.bf16.mxu0 0
    %494 = vmatpush1.bf16.msra.mxu0 0
    %495 = vmatprep.subr.bf16.mxu0 0
    %496 = vmatpush1.bf16.msra.mxu0 0
    %497 = vmatprep.subr.bf16.mxu0 0
    %498 = vmatpush1.bf16.msra.mxu0 0
    %499 = vmatprep.subr.bf16.mxu0 0
    %500 = vmatpush1.bf16.msra.mxu0 0
    %501 = vmatprep.subr.bf16.mxu0 0
    %502 = vmatpush1.bf16.msra.mxu0 0
    %503 = vmatprep.subr.bf16.mxu0 0
    %504 = vmatpush1.bf16.msra.mxu0 0
    %505 = vmatprep.mubr.bf16.mxu0 0
    %506 = vmatmul.mubr.bf16.gmra.mrb[0].mxu0 %v471
    %v507 = vpop.f32.mrb[0].mxu0
    %v508 = vadd.f32 0.0, %v507
    %v509 = vpop.f32.mrb[0].mxu0
    %v510 = vpop.f32.mrb[0].mxu0
    %v511 = vpop.f32.mrb[0].mxu0
    %512 = vdwg.mxu0
    %v513 = vadd.f32 %v135, %v508
    %v514 = vxor.u32 %v513, 2147483648
    %v515 = vmul.f32 %v514, 1.442695
    %v516 = vpow.pop %v515
    %v517 = vadd.f32 %v516, 1.0
    %v518 = vrcp.pop %v517
    %v519 = vmul.f32 1.0, %v518
    %v520 = vtanh.pop %v513
    %v521 = vmul.f32 %v519, %v454
    %523 = vrot.lane.b32.xlu0 %v520, 64
    %v524 = vpop.permute.xlu0 %523
    %v526 = vmul.f32 %v519, %v524
    %528 = vrot.lane.b32.xlu0 %v526, 32
    %v529 = vpop.permute.xlu0 %528
    %v531 = vadd.f32 %v521, %v529
    %v532 = vtanh.pop %v531
    %534 = vrot.lane.b32.xlu0 %v532, 64
    %v535 = vpop.permute.xlu0 %534
    %v537 = vmul.f32 %v519, %v535
    %539 = vrot.lane.b32.xlu0 %v537, 32
    %v540 = vpop.permute.xlu0 %539
    %542 = vst.msk [vmem:[#allocation2 + $0x20] sm:$0xff] %vm161, %v540
    %v543 = vpack.c.bf16 %v537, %v537
    %545 = vrot.lane.b32.xlu0 %v543, 32
    %v546 = vpop.permute.xlu0 %545
    %v548 = vsel %vm161, %v546, 0
    %550 = vmatprep.subr.bf16.mxu0 0
    %551 = vmatpush1.bf16.msra.mxu0 %v157
    %552 = vmatprep.subr.bf16.mxu0 0
    %553 = vmatpush1.bf16.msra.mxu0 %v158
    %554 = vmatprep.subr.bf16.mxu0 0
    %555 = vmatpush1.bf16.msra.mxu0 0
    %556 = vmatprep.subr.bf16.mxu0 0
    %557 = vmatpush1.bf16.msra.mxu0 0
    %558 = vmatprep.subr.bf16.mxu0 0
    %559 = vmatpush1.bf16.msra.mxu0 0
    %560 = vmatprep.subr.bf16.mxu0 0
    %561 = vmatpush1.bf16.msra.mxu0 0
    %562 = vmatprep.subr.bf16.mxu0 0
    %563 = vmatpush1.bf16.msra.mxu0 0
    %564 = vmatprep.subr.bf16.mxu0 0
    %565 = vmatpush1.bf16.msra.mxu0 0
    %566 = vmatprep.subr.bf16.mxu0 0
    %567 = vmatpush1.bf16.msra.mxu0 0
    %568 = vmatprep.subr.bf16.mxu0 0
    %569 = vmatpush1.bf16.msra.mxu0 0
    %570 = vmatprep.subr.bf16.mxu0 0
    %571 = vmatpush1.bf16.msra.mxu0 0
    %572 = vmatprep.subr.bf16.mxu0 0
    %573 = vmatpush1.bf16.msra.mxu0 0
    %574 = vmatprep.subr.bf16.mxu0 0
    %575 = vmatpush1.bf16.msra.mxu0 0
    %576 = vmatprep.subr.bf16.mxu0 0
    %577 = vmatpush1.bf16.msra.mxu0 0
    %578 = vmatprep.subr.bf16.mxu0 0
    %579 = vmatpush1.bf16.msra.mxu0 0
    %580 = vmatprep.subr.bf16.mxu0 0
    %581 = vmatpush1.bf16.msra.mxu0 0
    %582 = vmatprep.mubr.bf16.mxu0 0
    %583 = vmatmul.mubr.bf16.gmra.mrb[0].mxu0 %v548
    %v584 = vpop.f32.mrb[0].mxu0
    %v585 = vadd.f32 0.0, %v584
    %v586 = vpop.f32.mrb[0].mxu0
    %v587 = vpop.f32.mrb[0].mxu0
    %v588 = vpop.f32.mrb[0].mxu0
    %589 = vdwg.mxu0
    %v590 = vadd.f32 %v138, %v585
    %v591 = vxor.u32 %v590, 2147483648
    %v592 = vmul.f32 %v591, 1.442695
    %v593 = vpow.pop %v592
    %v594 = vadd.f32 %v593, 1.0
    %v595 = vrcp.pop %v594
    %v596 = vmul.f32 1.0, %v595
    %v597 = vtanh.pop %v590
    %v598 = vmul.f32 %v596, %v531
    %600 = vrot.lane.b32.xlu0 %v597, 64
    %v601 = vpop.permute.xlu0 %600
    %v603 = vmul.f32 %v596, %v601
    %605 = vrot.lane.b32.xlu0 %v603, 32
    %v606 = vpop.permute.xlu0 %605
    %v608 = vadd.f32 %v598, %v606
    %v609 = vtanh.pop %v608
    %611 = vrot.lane.b32.xlu0 %v609, 64
    %v612 = vpop.permute.xlu0 %611
    %v614 = vmul.f32 %v596, %v612
    %616 = vrot.lane.b32.xlu0 %v614, 32
    %v617 = vpop.permute.xlu0 %616
    %619 = vst.msk [vmem:[#allocation2 + $0x28] sm:$0xff] %vm161, %v617
    %v620 = vpack.c.bf16 %v614, %v614
    %622 = vrot.lane.b32.xlu0 %v620, 32
    %v623 = vpop.permute.xlu0 %622
    %v625 = vsel %vm161, %v623, 0
    %627 = vmatprep.subr.bf16.mxu0 0
    %628 = vmatpush1.bf16.msra.mxu0 %v157
    %629 = vmatprep.subr.bf16.mxu0 0
    %630 = vmatpush1.bf16.msra.mxu0 %v158
    %631 = vmatprep.subr.bf16.mxu0 0
    %632 = vmatpush1.bf16.msra.mxu0 0
    %633 = vmatprep.subr.bf16.mxu0 0
    %634 = vmatpush1.bf16.msra.mxu0 0
    %635 = vmatprep.subr.bf16.mxu0 0
    %636 = vmatpush1.bf16.msra.mxu0 0
    %637 = vmatprep.subr.bf16.mxu0 0
    %638 = vmatpush1.bf16.msra.mxu0 0
    %639 = vmatprep.subr.bf16.mxu0 0
    %640 = vmatpush1.bf16.msra.mxu0 0
    %641 = vmatprep.subr.bf16.mxu0 0
    %642 = vmatpush1.bf16.msra.mxu0 0
    %643 = vmatprep.subr.bf16.mxu0 0
    %644 = vmatpush1.bf16.msra.mxu0 0
    %645 = vmatprep.subr.bf16.mxu0 0
    %646 = vmatpush1.bf16.msra.mxu0 0
    %647 = vmatprep.subr.bf16.mxu0 0
    %648 = vmatpush1.bf16.msra.mxu0 0
    %649 = vmatprep.subr.bf16.mxu0 0
    %650 = vmatpush1.bf16.msra.mxu0 0
    %651 = vmatprep.subr.bf16.mxu0 0
    %652 = vmatpush1.bf16.msra.mxu0 0
    %653 = vmatprep.subr.bf16.mxu0 0
    %654 = vmatpush1.bf16.msra.mxu0 0
    %655 = vmatprep.subr.bf16.mxu0 0
    %656 = vmatpush1.bf16.msra.mxu0 0
    %657 = vmatprep.subr.bf16.mxu0 0
    %658 = vmatpush1.bf16.msra.mxu0 0
    %659 = vmatprep.mubr.bf16.mxu0 0
    %660 = vmatmul.mubr.bf16.gmra.mrb[0].mxu0 %v625
    %v661 = vpop.f32.mrb[0].mxu0
    %v662 = vadd.f32 0.0, %v661
    %v663 = vpop.f32.mrb[0].mxu0
    %v664 = vpop.f32.mrb[0].mxu0
    %v665 = vpop.f32.mrb[0].mxu0
    %666 = vdwg.mxu0
    %v667 = vadd.f32 %v143, %v662
    %v668 = vxor.u32 %v667, 2147483648
    %v669 = vmul.f32 %v668, 1.442695
    %v670 = vpow.pop %v669
    %v671 = vadd.f32 %v670, 1.0
    %v672 = vrcp.pop %v671
    %v673 = vmul.f32 1.0, %v672
    %v674 = vtanh.pop %v667
    %v675 = vmul.f32 %v673, %v608
    %677 = vrot.lane.b32.xlu0 %v674, 64
    %v678 = vpop.permute.xlu0 %677
    %v680 = vmul.f32 %v673, %v678
    %682 = vrot.lane.b32.xlu0 %v680, 32
    %v683 = vpop.permute.xlu0 %682
    %v685 = vadd.f32 %v675, %v683
    %v686 = vtanh.pop %v685
    %688 = vrot.lane.b32.xlu0 %v686, 64
    %v689 = vpop.permute.xlu0 %688
    %v691 = vmul.f32 %v673, %v689
    %693 = vrot.lane.b32.xlu0 %v691, 32
    %v694 = vpop.permute.xlu0 %693
    %696 = vst.msk [vmem:[#allocation2 + $0x30] sm:$0xff] %vm161, %v694
    %v697 = vpack.c.bf16 %v691, %v691
    %699 = vrot.lane.b32.xlu0 %v697, 32
    %v700 = vpop.permute.xlu0 %699
    %v702 = vsel %vm161, %v700, 0
    %704 = vmatprep.subr.bf16.mxu0 0
    %705 = vmatpush1.bf16.msra.mxu0 %v157
    %706 = vmatprep.subr.bf16.mxu0 0
    %707 = vmatpush1.bf16.msra.mxu0 %v158
    %708 = vmatprep.subr.bf16.mxu0 0
    %709 = vmatpush1.bf16.msra.mxu0 0
    %710 = vmatprep.subr.bf16.mxu0 0
    %711 = vmatpush1.bf16.msra.mxu0 0
    %712 = vmatprep.subr.bf16.mxu0 0
    %713 = vmatpush1.bf16.msra.mxu0 0
    %714 = vmatprep.subr.bf16.mxu0 0
    %715 = vmatpush1.bf16.msra.mxu0 0
    %716 = vmatprep.subr.bf16.mxu0 0
    %717 = vmatpush1.bf16.msra.mxu0 0
    %718 = vmatprep.subr.bf16.mxu0 0
    %719 = vmatpush1.bf16.msra.mxu0 0
    %720 = vmatprep.subr.bf16.mxu0 0
    %721 = vmatpush1.bf16.msra.mxu0 0
    %722 = vmatprep.subr.bf16.mxu0 0
    %723 = vmatpush1.bf16.msra.mxu0 0
    %724 = vmatprep.subr.bf16.mxu0 0
    %725 = vmatpush1.bf16.msra.mxu0 0
    %726 = vmatprep.subr.bf16.mxu0 0
    %727 = vmatpush1.bf16.msra.mxu0 0
    %728 = vmatprep.subr.bf16.mxu0 0
    %729 = vmatpush1.bf16.msra.mxu0 0
    %730 = vmatprep.subr.bf16.mxu0 0
    %731 = vmatpush1.bf16.msra.mxu0 0
    %732 = vmatprep.subr.bf16.mxu0 0
    %733 = vmatpush1.bf16.msra.mxu0 0
    %734 = vmatprep.subr.bf16.mxu0 0
    %735 = vmatpush1.bf16.msra.mxu0 0
    %736 = vmatprep.mubr.bf16.mxu0 0
    %737 = vmatmul.mubr.bf16.gmra.mrb[0].mxu0 %v702
    %v738 = vpop.f32.mrb[0].mxu0
    %v739 = vadd.f32 0.0, %v738
    %v740 = vpop.f32.mrb[0].mxu0
    %v741 = vpop.f32.mrb[0].mxu0
    %v742 = vpop.f32.mrb[0].mxu0
    %743 = vdwg.mxu0
    %v744 = vadd.f32 %v146, %v739
    %v745 = vxor.u32 %v744, 2147483648
    %v746 = vmul.f32 %v745, 1.442695
    %v747 = vpow.pop %v746
    %v748 = vadd.f32 %v747, 1.0
    %v749 = vrcp.pop %v748
    %v750 = vmul.f32 1.0, %v749
    %v751 = vtanh.pop %v744
    %v752 = vmul.f32 %v750, %v685
    %754 = vrot.lane.b32.xlu0 %v751, 64
    %v755 = vpop.permute.xlu0 %754
    %v757 = vmul.f32 %v750, %v755
    %759 = vrot.lane.b32.xlu0 %v757, 32
    %v760 = vpop.permute.xlu0 %759
    %v762 = vadd.f32 %v752, %v760
    %v763 = vtanh.pop %v762
    %765 = vrot.lane.b32.xlu0 %v763, 64
    %v766 = vpop.permute.xlu0 %765
    %v768 = vmul.f32 %v750, %v766
    %770 = vrot.lane.b32.xlu0 %v768, 32
    %v771 = vpop.permute.xlu0 %770
    %773 = vst.msk [vmem:[#allocation2 + $0x38] sm:$0xff] %vm161, %v771
    %v774 = vld [vmem:[#allocation2] sm:$0xff]
    %v775 = vld [vmem:[#allocation2 + $0x8] sm:$0xff]
    %v776 = vld [vmem:[#allocation2 + $0x10] sm:$0xff]
    %v777 = vld [vmem:[#allocation2 + $0x18] sm:$0xff]
    %v778 = vld [vmem:[#allocation2 + $0x20] sm:$0xff]
    %v779 = vld [vmem:[#allocation2 + $0x28] sm:$0xff]
    %v780 = vld [vmem:[#allocation2 + $0x30] sm:$0xff]
    %v781 = vld [vmem:[#allocation2 + $0x38] sm:$0xff]
    %v782 = vpack.c.bf16 %v775, %v774
    %v783 = vpack.c.bf16 %v777, %v776
    %v784 = vpack.c.bf16 %v779, %v778
    %v785 = vpack.c.bf16 %v781, %v780
    %v786 = vld [vmem:[%s2 + $0x8] sm:$0xf]
    %v787 = vld [vmem:[%s2 + $0xc] sm:$0xf]
    %v788 = vld [vmem:[%s2 + $0x10] sm:$0xf]
    %v789 = vld [vmem:[%s2 + $0x14] sm:$0xf]
    %v790 = vld [vmem:[%s3 + $0x10] sm:$0xf]
    %v791 = vld [vmem:[%s3 + $0x14] sm:$0xf]
    %v792 = vld [vmem:[%s3 + $0x18] sm:$0xf]
    %v793 = vld [vmem:[%s3 + $0x1c] sm:$0xf]
    %v794 = vld [vmem:[%s4 + $0x1] sm:$0x1]
    %v795 = vlaneseq
    %v796 = vshrl.u32 %v795, 7
    %v797 = vsub.s32 0, %v796
    %v798 = vrot.slane %v794, %v797
    %v803 = vunpack.c.l.b16 %v786
    %v804 = vunpack.c.l.b16 %v787
    %v805 = vunpack.c.l.b16 %v788
    %v806 = vunpack.c.l.b16 %v789
    %v807 = vpack.c.b16 %v804, %v803
    %v808 = vpack.c.b16 %v806, %v805
    %v812 = vsel %vm161, %v782, 0
    %v815 = vsel %vm161, %v783, 0
    %v818 = vsel %vm161, %v784, 0
    %v821 = vsel %vm161, %v785, 0
    %823 = vmatprep.subr.bf16.mxu0 0
    %824 = vmatpush1.bf16.msra.mxu0 %v807
    %825 = vmatprep.subr.bf16.mxu0 0
    %826 = vmatpush1.bf16.msra.mxu0 %v808
    %827 = vmatprep.subr.bf16.mxu0 0
    %828 = vmatpush1.bf16.msra.mxu0 0
    %829 = vmatprep.subr.bf16.mxu0 0
    %830 = vmatpush1.bf16.msra.mxu0 0
    %831 = vmatprep.subr.bf16.mxu0 0
    %832 = vmatpush1.bf16.msra.mxu0 0
    %833 = vmatprep.subr.bf16.mxu0 0
    %834 = vmatpush1.bf16.msra.mxu0 0
    %835 = vmatprep.subr.bf16.mxu0 0
    %836 = vmatpush1.bf16.msra.mxu0 0
    %837 = vmatprep.subr.bf16.mxu0 0
    %838 = vmatpush1.bf16.msra.mxu0 0
    %839 = vmatprep.subr.bf16.mxu0 0
    %840 = vmatpush1.bf16.msra.mxu0 0
    %841 = vmatprep.subr.bf16.mxu0 0
    %842 = vmatpush1.bf16.msra.mxu0 0
    %843 = vmatprep.subr.bf16.mxu0 0
    %844 = vmatpush1.bf16.msra.mxu0 0
    %845 = vmatprep.subr.bf16.mxu0 0
    %846 = vmatpush1.bf16.msra.mxu0 0
    %847 = vmatprep.subr.bf16.mxu0 0
    %848 = vmatpush1.bf16.msra.mxu0 0
    %849 = vmatprep.subr.bf16.mxu0 0
    %850 = vmatpush1.bf16.msra.mxu0 0
    %851 = vmatprep.subr.bf16.mxu0 0
    %852 = vmatpush1.bf16.msra.mxu0 0
    %853 = vmatprep.subr.bf16.mxu0 0
    %854 = vmatpush1.bf16.msra.mxu0 0
    %855 = vmatprep.mubr.bf16.mxu0 0
    %856 = vmatmul.mubr.bf16.gmra.mrb[0].mxu0 %v812
    %v857 = vpop.f32.mrb[0].mxu0
    %v858 = vadd.f32 %v798, %v857
    %v859 = vpop.f32.mrb[0].mxu0
    %v860 = vpop.f32.mrb[0].mxu0
    %v861 = vadd.f32 %v798, %v860
    %v862 = vpop.f32.mrb[0].mxu0
    %863 = vmatprep.mubr.bf16.mxu0 0
    %864 = vmatmul.mubr.bf16.gmra.mrb[0].mxu0 %v815
    %v865 = vpop.f32.mrb[0].mxu0
    %v866 = vadd.f32 %v798, %v865
    %v867 = vpop.f32.mrb[0].mxu0
    %v868 = vpop.f32.mrb[0].mxu0
    %v869 = vadd.f32 %v798, %v868
    %v870 = vpop.f32.mrb[0].mxu0
    %871 = vmatprep.mubr.bf16.mxu0 0
    %872 = vmatmul.mubr.bf16.gmra.mrb[0].mxu0 %v818
    %v873 = vpop.f32.mrb[0].mxu0
    %v874 = vadd.f32 %v798, %v873
    %v875 = vpop.f32.mrb[0].mxu0
    %v876 = vpop.f32.mrb[0].mxu0
    %v877 = vadd.f32 %v798, %v876
    %v878 = vpop.f32.mrb[0].mxu0
    %879 = vmatprep.mubr.bf16.mxu0 0
    %880 = vmatmul.mubr.bf16.gmra.mrb[0].mxu0 %v821
    %v881 = vpop.f32.mrb[0].mxu0
    %v882 = vadd.f32 %v798, %v881
    %v883 = vpop.f32.mrb[0].mxu0
    %v884 = vpop.f32.mrb[0].mxu0
    %v885 = vadd.f32 %v798, %v884
    %v886 = vpop.f32.mrb[0].mxu0
    %887 = vdwg.mxu0
    %v892 = vunpack.c.l.b16 %v790
    %v893 = vunpack.c.l.b16 %v791
    %v894 = vunpack.c.l.b16 %v792
    %v895 = vunpack.c.l.b16 %v793
    %v896 = vpack.c.b16 %v893, %v892
    %v897 = vpack.c.b16 %v895, %v894
    %900 = vmatprep.subr.bf16.mxu0 0
    %901 = vmatpush1.bf16.msra.mxu0 %v896
    %902 = vmatprep.subr.bf16.mxu0 0
    %903 = vmatpush1.bf16.msra.mxu0 %v897
    %904 = vmatprep.subr.bf16.mxu0 0
    %905 = vmatpush1.bf16.msra.mxu0 0
    %906 = vmatprep.subr.bf16.mxu0 0
    %907 = vmatpush1.bf16.msra.mxu0 0
    %908 = vmatprep.subr.bf16.mxu0 0
    %909 = vmatpush1.bf16.msra.mxu0 0
    %910 = vmatprep.subr.bf16.mxu0 0
    %911 = vmatpush1.bf16.msra.mxu0 0
    %912 = vmatprep.subr.bf16.mxu0 0
    %913 = vmatpush1.bf16.msra.mxu0 0
    %914 = vmatprep.subr.bf16.mxu0 0
    %915 = vmatpush1.bf16.msra.mxu0 0
    %916 = vmatprep.subr.bf16.mxu0 0
    %917 = vmatpush1.bf16.msra.mxu0 0
    %918 = vmatprep.subr.bf16.mxu0 0
    %919 = vmatpush1.bf16.msra.mxu0 0
    %920 = vmatprep.subr.bf16.mxu0 0
    %921 = vmatpush1.bf16.msra.mxu0 0
    %922 = vmatprep.subr.bf16.mxu0 0
    %923 = vmatpush1.bf16.msra.mxu0 0
    %924 = vmatprep.subr.bf16.mxu0 0
    %925 = vmatpush1.bf16.msra.mxu0 0
    %926 = vmatprep.subr.bf16.mxu0 0
    %927 = vmatpush1.bf16.msra.mxu0 0
    %928 = vmatprep.subr.bf16.mxu0 0
    %929 = vmatpush1.bf16.msra.mxu0 0
    %930 = vmatprep.subr.bf16.mxu0 0
    %931 = vmatpush1.bf16.msra.mxu0 0
    %932 = vmatprep.mubr.bf16.mxu0 0
    %933 = vmatmul.mubr.bf16.gmra.mrb[0].mxu0 %v163
    %v934 = vpop.f32.mrb[0].mxu0
    %v935 = vadd.f32 0.0, %v934
    %v936 = vpop.f32.mrb[0].mxu0
    %v937 = vpop.f32.mrb[0].mxu0
    %v938 = vpop.f32.mrb[0].mxu0
    %939 = vdwg.mxu0
    %v940 = vadd.f32 %v858, %v935
    %v941 = vxor.u32 %v940, 2147483648
    %v942 = vmul.f32 %v941, 1.442695
    %v943 = vpow.pop %v942
    %v944 = vadd.f32 %v943, 1.0
    %v945 = vrcp.pop %v944
    %v946 = vmul.f32 1.0, %v945
    %v947 = vtanh.pop %v940
    %v948 = vmul.f32 %v946, 0.0
    %950 = vrot.lane.b32.xlu0 %v947, 64
    %v951 = vpop.permute.xlu0 %950
    %v953 = vmul.f32 %v946, %v951
    %955 = vrot.lane.b32.xlu0 %v953, 32
    %v956 = vpop.permute.xlu0 %955
    %v958 = vadd.f32 %v948, %v956
    %v959 = vtanh.pop %v958
    %961 = vrot.lane.b32.xlu0 %v959, 64
    %v962 = vpop.permute.xlu0 %961
    %v964 = vmul.f32 %v946, %v962
    %vm965 = vcmp.eq.s32.totalorder %v25, 0
    %v966 = vsel %vm965, 1, 0
    %967 = vset.pattern.permute.xlu0 0
    %968 = vperm.xlu0 %967, %v966
    %v969 = vpop.permute.xlu0 %968
    %vm970 = vcmp.eq.s32.totalorder %v969, 1
    %v971 = vsel %vm970, %v964, 0.0
    %v972 = vpack.c.bf16 %v964, %v964
    %974 = vrot.lane.b32.xlu0 %v972, 32
    %v975 = vpop.permute.xlu0 %974
    %v977 = vsel %vm161, %v975, 0
    %979 = vmatprep.subr.bf16.mxu0 0
    %980 = vmatpush1.bf16.msra.mxu0 %v896
    %981 = vmatprep.subr.bf16.mxu0 0
    %982 = vmatpush1.bf16.msra.mxu0 %v897
    %983 = vmatprep.subr.bf16.mxu0 0
    %984 = vmatpush1.bf16.msra.mxu0 0
    %985 = vmatprep.subr.bf16.mxu0 0
    %986 = vmatpush1.bf16.msra.mxu0 0
    %987 = vmatprep.subr.bf16.mxu0 0
    %988 = vmatpush1.bf16.msra.mxu0 0
    %989 = vmatprep.subr.bf16.mxu0 0
    %990 = vmatpush1.bf16.msra.mxu0 0
    %991 = vmatprep.subr.bf16.mxu0 0
    %992 = vmatpush1.bf16.msra.mxu0 0
    %993 = vmatprep.subr.bf16.mxu0 0
    %994 = vmatpush1.bf16.msra.mxu0 0
    %995 = vmatprep.subr.bf16.mxu0 0
    %996 = vmatpush1.bf16.msra.mxu0 0
    %997 = vmatprep.subr.bf16.mxu0 0
    %998 = vmatpush1.bf16.msra.mxu0 0
    %999 = vmatprep.subr.bf16.mxu0 0
    %1000 = vmatpush1.bf16.msra.mxu0 0
    %1001 = vmatprep.subr.bf16.mxu0 0
    %1002 = vmatpush1.bf16.msra.mxu0 0
    %1003 = vmatprep.subr.bf16.mxu0 0
    %1004 = vmatpush1.bf16.msra.mxu0 0
    %1005 = vmatprep.subr.bf16.mxu0 0
    %1006 = vmatpush1.bf16.msra.mxu0 0
    %1007 = vmatprep.subr.bf16.mxu0 0
    %1008 = vmatpush1.bf16.msra.mxu0 0
    %1009 = vmatprep.subr.bf16.mxu0 0
    %1010 = vmatpush1.bf16.msra.mxu0 0
    %1011 = vmatprep.mubr.bf16.mxu0 0
    %1012 = vmatmul.mubr.bf16.gmra.mrb[0].mxu0 %v977
    %v1013 = vpop.f32.mrb[0].mxu0
    %v1014 = vadd.f32 0.0, %v1013
    %v1015 = vpop.f32.mrb[0].mxu0
    %v1016 = vpop.f32.mrb[0].mxu0
    %v1017 = vpop.f32.mrb[0].mxu0
    %1018 = vdwg.mxu0
    %v1019 = vadd.f32 %v861, %v1014
    %v1020 = vxor.u32 %v1019, 2147483648
    %v1021 = vmul.f32 %v1020, 1.442695
    %v1022 = vpow.pop %v1021
    %v1023 = vadd.f32 %v1022, 1.0
    %v1024 = vrcp.pop %v1023
    %v1025 = vmul.f32 1.0, %v1024
    %v1026 = vtanh.pop %v1019
    %v1027 = vmul.f32 %v1025, %v958
    %1029 = vrot.lane.b32.xlu0 %v1026, 64
    %v1030 = vpop.permute.xlu0 %1029
    %v1032 = vmul.f32 %v1025, %v1030
    %1034 = vrot.lane.b32.xlu0 %v1032, 32
    %v1035 = vpop.permute.xlu0 %1034
    %v1037 = vadd.f32 %v1027, %v1035
    %v1038 = vtanh.pop %v1037
    %1040 = vrot.lane.b32.xlu0 %v1038, 64
    %v1041 = vpop.permute.xlu0 %1040
    %v1043 = vmul.f32 %v1025, %v1041
    %vm1044 = vcmp.eq.s32.totalorder %v25, 1
    %v1045 = vsel %vm1044, 1, 0
    %1046 = vset.pattern.permute.xlu0 0
    %1047 = vperm.xlu0 %1046, %v1045
    %v1048 = vpop.permute.xlu0 %1047
    %vm1049 = vcmp.eq.s32.totalorder %v1048, 1
    %v1050 = vsel %vm1049, %v1043, %v971
    %v1051 = vpack.c.bf16 %v1043, %v1043
    %1053 = vrot.lane.b32.xlu0 %v1051, 32
    %v1054 = vpop.permute.xlu0 %1053
    %v1056 = vsel %vm161, %v1054, 0
    %1058 = vmatprep.subr.bf16.mxu0 0
    %1059 = vmatpush1.bf16.msra.mxu0 %v896
    %1060 = vmatprep.subr.bf16.mxu0 0
    %1061 = vmatpush1.bf16.msra.mxu0 %v897
    %1062 = vmatprep.subr.bf16.mxu0 0
    %1063 = vmatpush1.bf16.msra.mxu0 0
    %1064 = vmatprep.subr.bf16.mxu0 0
    %1065 = vmatpush1.bf16.msra.mxu0 0
    %1066 = vmatprep.subr.bf16.mxu0 0
    %1067 = vmatpush1.bf16.msra.mxu0 0
    %1068 = vmatprep.subr.bf16.mxu0 0
    %1069 = vmatpush1.bf16.msra.mxu0 0
    %1070 = vmatprep.subr.bf16.mxu0 0
    %1071 = vmatpush1.bf16.msra.mxu0 0
    %1072 = vmatprep.subr.bf16.mxu0 0
    %1073 = vmatpush1.bf16.msra.mxu0 0
    %1074 = vmatprep.subr.bf16.mxu0 0
    %1075 = vmatpush1.bf16.msra.mxu0 0
    %1076 = vmatprep.subr.bf16.mxu0 0
    %1077 = vmatpush1.bf16.msra.mxu0 0
    %1078 = vmatprep.subr.bf16.mxu0 0
    %1079 = vmatpush1.bf16.msra.mxu0 0
    %1080 = vmatprep.subr.bf16.mxu0 0
    %1081 = vmatpush1.bf16.msra.mxu0 0
    %1082 = vmatprep.subr.bf16.mxu0 0
    %1083 = vmatpush1.bf16.msra.mxu0 0
    %1084 = vmatprep.subr.bf16.mxu0 0
    %1085 = vmatpush1.bf16.msra.mxu0 0
    %1086 = vmatprep.subr.bf16.mxu0 0
    %1087 = vmatpush1.bf16.msra.mxu0 0
    %1088 = vmatprep.subr.bf16.mxu0 0
    %1089 = vmatpush1.bf16.msra.mxu0 0
    %1090 = vmatprep.mubr.bf16.mxu0 0
    %1091 = vmatmul.mubr.bf16.gmra.mrb[0].mxu0 %v1056
    %v1092 = vpop.f32.mrb[0].mxu0
    %v1093 = vadd.f32 0.0, %v1092
    %v1094 = vpop.f32.mrb[0].mxu0
    %v1095 = vpop.f32.mrb[0].mxu0
    %v1096 = vpop.f32.mrb[0].mxu0
    %1097 = vdwg.mxu0
    %v1098 = vadd.f32 %v866, %v1093
    %v1099 = vxor.u32 %v1098, 2147483648
    %v1100 = vmul.f32 %v1099, 1.442695
    %v1101 = vpow.pop %v1100
    %v1102 = vadd.f32 %v1101, 1.0
    %v1103 = vrcp.pop %v1102
    %v1104 = vmul.f32 1.0, %v1103
    %v1105 = vtanh.pop %v1098
    %v1106 = vmul.f32 %v1104, %v1037
    %1108 = vrot.lane.b32.xlu0 %v1105, 64
    %v1109 = vpop.permute.xlu0 %1108
    %v1111 = vmul.f32 %v1104, %v1109
    %1113 = vrot.lane.b32.xlu0 %v1111, 32
    %v1114 = vpop.permute.xlu0 %1113
    %v1116 = vadd.f32 %v1106, %v1114
    %v1117 = vtanh.pop %v1116
    %1119 = vrot.lane.b32.xlu0 %v1117, 64
    %v1120 = vpop.permute.xlu0 %1119
    %v1122 = vmul.f32 %v1104, %v1120
    %vm1123 = vcmp.eq.s32.totalorder %v25, 2
    %v1124 = vsel %vm1123, 1, 0
    %1125 = vset.pattern.permute.xlu0 0
    %1126 = vperm.xlu0 %1125, %v1124
    %v1127 = vpop.permute.xlu0 %1126
    %vm1128 = vcmp.eq.s32.totalorder %v1127, 1
    %v1129 = vsel %vm1128, %v1122, %v1050
    %v1130 = vpack.c.bf16 %v1122, %v1122
    %1132 = vrot.lane.b32.xlu0 %v1130, 32
    %v1133 = vpop.permute.xlu0 %1132
    %v1135 = vsel %vm161, %v1133, 0
    %1137 = vmatprep.subr.bf16.mxu0 0
    %1138 = vmatpush1.bf16.msra.mxu0 %v896
    %1139 = vmatprep.subr.bf16.mxu0 0
    %1140 = vmatpush1.bf16.msra.mxu0 %v897
    %1141 = vmatprep.subr.bf16.mxu0 0
    %1142 = vmatpush1.bf16.msra.mxu0 0
    %1143 = vmatprep.subr.bf16.mxu0 0
    %1144 = vmatpush1.bf16.msra.mxu0 0
    %1145 = vmatprep.subr.bf16.mxu0 0
    %1146 = vmatpush1.bf16.msra.mxu0 0
    %1147 = vmatprep.subr.bf16.mxu0 0
    %1148 = vmatpush1.bf16.msra.mxu0 0
    %1149 = vmatprep.subr.bf16.mxu0 0
    %1150 = vmatpush1.bf16.msra.mxu0 0
    %1151 = vmatprep.subr.bf16.mxu0 0
    %1152 = vmatpush1.bf16.msra.mxu0 0
    %1153 = vmatprep.subr.bf16.mxu0 0
    %1154 = vmatpush1.bf16.msra.mxu0 0
    %1155 = vmatprep.subr.bf16.mxu0 0
    %1156 = vmatpush1.bf16.msra.mxu0 0
    %1157 = vmatprep.subr.bf16.mxu0 0
    %1158 = vmatpush1.bf16.msra.mxu0 0
    %1159 = vmatprep.subr.bf16.mxu0 0
    %1160 = vmatpush1.bf16.msra.mxu0 0
    %1161 = vmatprep.subr.bf16.mxu0 0
    %1162 = vmatpush1.bf16.msra.mxu0 0
    %1163 = vmatprep.subr.bf16.mxu0 0
    %1164 = vmatpush1.bf16.msra.mxu0 0
    %1165 = vmatprep.subr.bf16.mxu0 0
    %1166 = vmatpush1.bf16.msra.mxu0 0
    %1167 = vmatprep.subr.bf16.mxu0 0
    %1168 = vmatpush1.bf16.msra.mxu0 0
    %1169 = vmatprep.mubr.bf16.mxu0 0
    %1170 = vmatmul.mubr.bf16.gmra.mrb[0].mxu0 %v1135
    %v1171 = vpop.f32.mrb[0].mxu0
    %v1172 = vadd.f32 0.0, %v1171
    %v1173 = vpop.f32.mrb[0].mxu0
    %v1174 = vpop.f32.mrb[0].mxu0
    %v1175 = vpop.f32.mrb[0].mxu0
    %1176 = vdwg.mxu0
    %v1177 = vadd.f32 %v869, %v1172
    %v1178 = vxor.u32 %v1177, 2147483648
    %v1179 = vmul.f32 %v1178, 1.442695
    %v1180 = vpow.pop %v1179
    %v1181 = vadd.f32 %v1180, 1.0
    %v1182 = vrcp.pop %v1181
    %v1183 = vmul.f32 1.0, %v1182
    %v1184 = vtanh.pop %v1177
    %v1185 = vmul.f32 %v1183, %v1116
    %1187 = vrot.lane.b32.xlu0 %v1184, 64
    %v1188 = vpop.permute.xlu0 %1187
    %v1190 = vmul.f32 %v1183, %v1188
    %1192 = vrot.lane.b32.xlu0 %v1190, 32
    %v1193 = vpop.permute.xlu0 %1192
    %v1195 = vadd.f32 %v1185, %v1193
    %v1196 = vtanh.pop %v1195
    %1198 = vrot.lane.b32.xlu0 %v1196, 64
    %v1199 = vpop.permute.xlu0 %1198
    %v1201 = vmul.f32 %v1183, %v1199
    %vm1202 = vcmp.eq.s32.totalorder %v25, 3
    %v1203 = vsel %vm1202, 1, 0
    %1204 = vset.pattern.permute.xlu0 0
    %1205 = vperm.xlu0 %1204, %v1203
    %v1206 = vpop.permute.xlu0 %1205
    %vm1207 = vcmp.eq.s32.totalorder %v1206, 1
    %v1208 = vsel %vm1207, %v1201, %v1129
    %v1209 = vpack.c.bf16 %v1201, %v1201
    %1211 = vrot.lane.b32.xlu0 %v1209, 32
    %v1212 = vpop.permute.xlu0 %1211
    %v1214 = vsel %vm161, %v1212, 0
    %1216 = vmatprep.subr.bf16.mxu0 0
    %1217 = vmatpush1.bf16.msra.mxu0 %v896
    %1218 = vmatprep.subr.bf16.mxu0 0
    %1219 = vmatpush1.bf16.msra.mxu0 %v897
    %1220 = vmatprep.subr.bf16.mxu0 0
    %1221 = vmatpush1.bf16.msra.mxu0 0
    %1222 = vmatprep.subr.bf16.mxu0 0
    %1223 = vmatpush1.bf16.msra.mxu0 0
    %1224 = vmatprep.subr.bf16.mxu0 0
    %1225 = vmatpush1.bf16.msra.mxu0 0
    %1226 = vmatprep.subr.bf16.mxu0 0
    %1227 = vmatpush1.bf16.msra.mxu0 0
    %1228 = vmatprep.subr.bf16.mxu0 0
    %1229 = vmatpush1.bf16.msra.mxu0 0
    %1230 = vmatprep.subr.bf16.mxu0 0
    %1231 = vmatpush1.bf16.msra.mxu0 0
    %1232 = vmatprep.subr.bf16.mxu0 0
    %1233 = vmatpush1.bf16.msra.mxu0 0
    %1234 = vmatprep.subr.bf16.mxu0 0
    %1235 = vmatpush1.bf16.msra.mxu0 0
    %1236 = vmatprep.subr.bf16.mxu0 0
    %1237 = vmatpush1.bf16.msra.mxu0 0
    %1238 = vmatprep.subr.bf16.mxu0 0
    %1239 = vmatpush1.bf16.msra.mxu0 0
    %1240 = vmatprep.subr.bf16.mxu0 0
    %1241 = vmatpush1.bf16.msra.mxu0 0
    %1242 = vmatprep.subr.bf16.mxu0 0
    %1243 = vmatpush1.bf16.msra.mxu0 0
    %1244 = vmatprep.subr.bf16.mxu0 0
    %1245 = vmatpush1.bf16.msra.mxu0 0
    %1246 = vmatprep.subr.bf16.mxu0 0
    %1247 = vmatpush1.bf16.msra.mxu0 0
    %1248 = vmatprep.mubr.bf16.mxu0 0
    %1249 = vmatmul.mubr.bf16.gmra.mrb[0].mxu0 %v1214
    %v1250 = vpop.f32.mrb[0].mxu0
    %v1251 = vadd.f32 0.0, %v1250
    %v1252 = vpop.f32.mrb[0].mxu0
    %v1253 = vpop.f32.mrb[0].mxu0
    %v1254 = vpop.f32.mrb[0].mxu0
    %1255 = vdwg.mxu0
    %v1256 = vadd.f32 %v874, %v1251
    %v1257 = vxor.u32 %v1256, 2147483648
    %v1258 = vmul.f32 %v1257, 1.442695
    %v1259 = vpow.pop %v1258
    %v1260 = vadd.f32 %v1259, 1.0
    %v1261 = vrcp.pop %v1260
    %v1262 = vmul.f32 1.0, %v1261
    %v1263 = vtanh.pop %v1256
    %v1264 = vmul.f32 %v1262, %v1195
    %1266 = vrot.lane.b32.xlu0 %v1263, 64
    %v1267 = vpop.permute.xlu0 %1266
    %v1269 = vmul.f32 %v1262, %v1267
    %1271 = vrot.lane.b32.xlu0 %v1269, 32
    %v1272 = vpop.permute.xlu0 %1271
    %v1274 = vadd.f32 %v1264, %v1272
    %v1275 = vtanh.pop %v1274
    %1277 = vrot.lane.b32.xlu0 %v1275, 64
    %v1278 = vpop.permute.xlu0 %1277
    %v1280 = vmul.f32 %v1262, %v1278
    %vm1281 = vcmp.eq.s32.totalorder %v25, 4
    %v1282 = vsel %vm1281, 1, 0
    %1283 = vset.pattern.permute.xlu0 0
    %1284 = vperm.xlu0 %1283, %v1282
    %v1285 = vpop.permute.xlu0 %1284
    %vm1286 = vcmp.eq.s32.totalorder %v1285, 1
    %v1287 = vsel %vm1286, %v1280, %v1208
    %v1288 = vpack.c.bf16 %v1280, %v1280
    %1290 = vrot.lane.b32.xlu0 %v1288, 32
    %v1291 = vpop.permute.xlu0 %1290
    %v1293 = vsel %vm161, %v1291, 0
    %1295 = vmatprep.subr.bf16.mxu0 0
    %1296 = vmatpush1.bf16.msra.mxu0 %v896
    %1297 = vmatprep.subr.bf16.mxu0 0
    %1298 = vmatpush1.bf16.msra.mxu0 %v897
    %1299 = vmatprep.subr.bf16.mxu0 0
    %1300 = vmatpush1.bf16.msra.mxu0 0
    %1301 = vmatprep.subr.bf16.mxu0 0
    %1302 = vmatpush1.bf16.msra.mxu0 0
    %1303 = vmatprep.subr.bf16.mxu0 0
    %1304 = vmatpush1.bf16.msra.mxu0 0
    %1305 = vmatprep.subr.bf16.mxu0 0
    %1306 = vmatpush1.bf16.msra.mxu0 0
    %1307 = vmatprep.subr.bf16.mxu0 0
    %1308 = vmatpush1.bf16.msra.mxu0 0
    %1309 = vmatprep.subr.bf16.mxu0 0
    %1310 = vmatpush1.bf16.msra.mxu0 0
    %1311 = vmatprep.subr.bf16.mxu0 0
    %1312 = vmatpush1.bf16.msra.mxu0 0
    %1313 = vmatprep.subr.bf16.mxu0 0
    %1314 = vmatpush1.bf16.msra.mxu0 0
    %1315 = vmatprep.subr.bf16.mxu0 0
    %1316 = vmatpush1.bf16.msra.mxu0 0
    %1317 = vmatprep.subr.bf16.mxu0 0
    %1318 = vmatpush1.bf16.msra.mxu0 0
    %1319 = vmatprep.subr.bf16.mxu0 0
    %1320 = vmatpush1.bf16.msra.mxu0 0
    %1321 = vmatprep.subr.bf16.mxu0 0
    %1322 = vmatpush1.bf16.msra.mxu0 0
    %1323 = vmatprep.subr.bf16.mxu0 0
    %1324 = vmatpush1.bf16.msra.mxu0 0
    %1325 = vmatprep.subr.bf16.mxu0 0
    %1326 = vmatpush1.bf16.msra.mxu0 0
    %1327 = vmatprep.mubr.bf16.mxu0 0
    %1328 = vmatmul.mubr.bf16.gmra.mrb[0].mxu0 %v1293
    %v1329 = vpop.f32.mrb[0].mxu0
    %v1330 = vadd.f32 0.0, %v1329
    %v1331 = vpop.f32.mrb[0].mxu0
    %v1332 = vpop.f32.mrb[0].mxu0
    %v1333 = vpop.f32.mrb[0].mxu0
    %1334 = vdwg.mxu0
    %v1335 = vadd.f32 %v877, %v1330
    %v1336 = vxor.u32 %v1335, 2147483648
    %v1337 = vmul.f32 %v1336, 1.442695
    %v1338 = vpow.pop %v1337
    %v1339 = vadd.f32 %v1338, 1.0
    %v1340 = vrcp.pop %v1339
    %v1341 = vmul.f32 1.0, %v1340
    %v1342 = vtanh.pop %v1335
    %v1343 = vmul.f32 %v1341, %v1274
    %1345 = vrot.lane.b32.xlu0 %v1342, 64
    %v1346 = vpop.permute.xlu0 %1345
    %v1348 = vmul.f32 %v1341, %v1346
    %1350 = vrot.lane.b32.xlu0 %v1348, 32
    %v1351 = vpop.permute.xlu0 %1350
    %v1353 = vadd.f32 %v1343, %v1351
    %v1354 = vtanh.pop %v1353
    %1356 = vrot.lane.b32.xlu0 %v1354, 64
    %v1357 = vpop.permute.xlu0 %1356
    %v1359 = vmul.f32 %v1341, %v1357
    %vm1360 = vcmp.eq.s32.totalorder %v25, 5
    %v1361 = vsel %vm1360, 1, 0
    %1362 = vset.pattern.permute.xlu0 0
    %1363 = vperm.xlu0 %1362, %v1361
    %v1364 = vpop.permute.xlu0 %1363
    %vm1365 = vcmp.eq.s32.totalorder %v1364, 1
    %v1366 = vsel %vm1365, %v1359, %v1287
    %v1367 = vpack.c.bf16 %v1359, %v1359
    %1369 = vrot.lane.b32.xlu0 %v1367, 32
    %v1370 = vpop.permute.xlu0 %1369
    %v1372 = vsel %vm161, %v1370, 0
    %1374 = vmatprep.subr.bf16.mxu0 0
    %1375 = vmatpush1.bf16.msra.mxu0 %v896
    %1376 = vmatprep.subr.bf16.mxu0 0
    %1377 = vmatpush1.bf16.msra.mxu0 %v897
    %1378 = vmatprep.subr.bf16.mxu0 0
    %1379 = vmatpush1.bf16.msra.mxu0 0
    %1380 = vmatprep.subr.bf16.mxu0 0
    %1381 = vmatpush1.bf16.msra.mxu0 0
    %1382 = vmatprep.subr.bf16.mxu0 0
    %1383 = vmatpush1.bf16.msra.mxu0 0
    %1384 = vmatprep.subr.bf16.mxu0 0
    %1385 = vmatpush1.bf16.msra.mxu0 0
    %1386 = vmatprep.subr.bf16.mxu0 0
    %1387 = vmatpush1.bf16.msra.mxu0 0
    %1388 = vmatprep.subr.bf16.mxu0 0
    %1389 = vmatpush1.bf16.msra.mxu0 0
    %1390 = vmatprep.subr.bf16.mxu0 0
    %1391 = vmatpush1.bf16.msra.mxu0 0
    %1392 = vmatprep.subr.bf16.mxu0 0
    %1393 = vmatpush1.bf16.msra.mxu0 0
    %1394 = vmatprep.subr.bf16.mxu0 0
    %1395 = vmatpush1.bf16.msra.mxu0 0
    %1396 = vmatprep.subr.bf16.mxu0 0
    %1397 = vmatpush1.bf16.msra.mxu0 0
    %1398 = vmatprep.subr.bf16.mxu0 0
    %1399 = vmatpush1.bf16.msra.mxu0 0
    %1400 = vmatprep.subr.bf16.mxu0 0
    %1401 = vmatpush1.bf16.msra.mxu0 0
    %1402 = vmatprep.subr.bf16.mxu0 0
    %1403 = vmatpush1.bf16.msra.mxu0 0
    %1404 = vmatprep.subr.bf16.mxu0 0
    %1405 = vmatpush1.bf16.msra.mxu0 0
    %1406 = vmatprep.mubr.bf16.mxu0 0
    %1407 = vmatmul.mubr.bf16.gmra.mrb[0].mxu0 %v1372
    %v1408 = vpop.f32.mrb[0].mxu0
    %v1409 = vadd.f32 0.0, %v1408
    %v1410 = vpop.f32.mrb[0].mxu0
    %v1411 = vpop.f32.mrb[0].mxu0
    %v1412 = vpop.f32.mrb[0].mxu0
    %1413 = vdwg.mxu0
    %v1414 = vadd.f32 %v882, %v1409
    %v1415 = vxor.u32 %v1414, 2147483648
    %v1416 = vmul.f32 %v1415, 1.442695
    %v1417 = vpow.pop %v1416
    %v1418 = vadd.f32 %v1417, 1.0
    %v1419 = vrcp.pop %v1418
    %v1420 = vmul.f32 1.0, %v1419
    %v1421 = vtanh.pop %v1414
    %v1422 = vmul.f32 %v1420, %v1353
    %1424 = vrot.lane.b32.xlu0 %v1421, 64
    %v1425 = vpop.permute.xlu0 %1424
    %v1427 = vmul.f32 %v1420, %v1425
    %1429 = vrot.lane.b32.xlu0 %v1427, 32
    %v1430 = vpop.permute.xlu0 %1429
    %v1432 = vadd.f32 %v1422, %v1430
    %v1433 = vtanh.pop %v1432
    %1435 = vrot.lane.b32.xlu0 %v1433, 64
    %v1436 = vpop.permute.xlu0 %1435
    %v1438 = vmul.f32 %v1420, %v1436
    %vm1439 = vcmp.eq.s32.totalorder %v25, 6
    %v1440 = vsel %vm1439, 1, 0
    %1441 = vset.pattern.permute.xlu0 0
    %1442 = vperm.xlu0 %1441, %v1440
    %v1443 = vpop.permute.xlu0 %1442
    %vm1444 = vcmp.eq.s32.totalorder %v1443, 1
    %v1445 = vsel %vm1444, %v1438, %v1366
    %v1446 = vpack.c.bf16 %v1438, %v1438
    %1448 = vrot.lane.b32.xlu0 %v1446, 32
    %v1449 = vpop.permute.xlu0 %1448
    %v1451 = vsel %vm161, %v1449, 0
    %1453 = vmatprep.subr.bf16.mxu0 0
    %1454 = vmatpush1.bf16.msra.mxu0 %v896
    %1455 = vmatprep.subr.bf16.mxu0 0
    %1456 = vmatpush1.bf16.msra.mxu0 %v897
    %1457 = vmatprep.subr.bf16.mxu0 0
    %1458 = vmatpush1.bf16.msra.mxu0 0
    %1459 = vmatprep.subr.bf16.mxu0 0
    %1460 = vmatpush1.bf16.msra.mxu0 0
    %1461 = vmatprep.subr.bf16.mxu0 0
    %1462 = vmatpush1.bf16.msra.mxu0 0
    %1463 = vmatprep.subr.bf16.mxu0 0
    %1464 = vmatpush1.bf16.msra.mxu0 0
    %1465 = vmatprep.subr.bf16.mxu0 0
    %1466 = vmatpush1.bf16.msra.mxu0 0
    %1467 = vmatprep.subr.bf16.mxu0 0
    %1468 = vmatpush1.bf16.msra.mxu0 0
    %1469 = vmatprep.subr.bf16.mxu0 0
    %1470 = vmatpush1.bf16.msra.mxu0 0
    %1471 = vmatprep.subr.bf16.mxu0 0
    %1472 = vmatpush1.bf16.msra.mxu0 0
    %1473 = vmatprep.subr.bf16.mxu0 0
    %1474 = vmatpush1.bf16.msra.mxu0 0
    %1475 = vmatprep.subr.bf16.mxu0 0
    %1476 = vmatpush1.bf16.msra.mxu0 0
    %1477 = vmatprep.subr.bf16.mxu0 0
    %1478 = vmatpush1.bf16.msra.mxu0 0
    %1479 = vmatprep.subr.bf16.mxu0 0
    %1480 = vmatpush1.bf16.msra.mxu0 0
    %1481 = vmatprep.subr.bf16.mxu0 0
    %1482 = vmatpush1.bf16.msra.mxu0 0
    %1483 = vmatprep.subr.bf16.mxu0 0
    %1484 = vmatpush1.bf16.msra.mxu0 0
    %1485 = vmatprep.mubr.bf16.mxu0 0
    %1486 = vmatmul.mubr.bf16.gmra.mrb[0].mxu0 %v1451
    %v1487 = vpop.f32.mrb[0].mxu0
    %v1488 = vadd.f32 0.0, %v1487
    %v1489 = vpop.f32.mrb[0].mxu0
    %v1490 = vpop.f32.mrb[0].mxu0
    %v1491 = vpop.f32.mrb[0].mxu0
    %1492 = vdwg.mxu0
    %v1493 = vadd.f32 %v885, %v1488
    %v1494 = vxor.u32 %v1493, 2147483648
    %v1495 = vmul.f32 %v1494, 1.442695
    %v1496 = vpow.pop %v1495
    %v1497 = vadd.f32 %v1496, 1.0
    %v1498 = vrcp.pop %v1497
    %v1499 = vmul.f32 1.0, %v1498
    %v1500 = vtanh.pop %v1493
    %v1501 = vmul.f32 %v1499, %v1432
    %1503 = vrot.lane.b32.xlu0 %v1500, 64
    %v1504 = vpop.permute.xlu0 %1503
    %v1506 = vmul.f32 %v1499, %v1504
    %1508 = vrot.lane.b32.xlu0 %v1506, 32
    %v1509 = vpop.permute.xlu0 %1508
    %v1511 = vadd.f32 %v1501, %v1509
    %v1512 = vtanh.pop %v1511
    %1514 = vrot.lane.b32.xlu0 %v1512, 64
    %v1515 = vpop.permute.xlu0 %1514
    %v1517 = vmul.f32 %v1499, %v1515
    %vm1518 = vcmp.eq.s32.totalorder %v25, 7
    %v1519 = vsel %vm1518, 1, 0
    %1520 = vset.pattern.permute.xlu0 0
    %1521 = vperm.xlu0 %1520, %v1519
    %v1522 = vpop.permute.xlu0 %1521
    %vm1523 = vcmp.eq.s32.totalorder %v1522, 1
    %v1524 = vsel %vm1523, %v1517, %v1445
    %v1525 = vld [vmem:[%s5] sm:$0xff]
    %v1526 = vld [vmem:[%s5 + $0x8] sm:$0xff]
    %v1527 = vld [vmem:[%s5 + $0x10] sm:$0xff]
    %v1528 = vld [vmem:[%s5 + $0x18] sm:$0xff]
    %v1529 = vld [vmem:[%s5 + $0x20] sm:$0x1]
    %v1530 = vlaneseq
    %v1531 = vshrl.u32 %v1530, 7
    %v1532 = vsub.s32 0, %v1531
    %v1533 = vrot.slane %v1529, %v1532
    %1535 = vrot.lane.b32.xlu0 %v1524, 32
    %v1536 = vpop.permute.xlu0 %1535
    %v1537 = vsel %vm161, %v1536, 0
    %1539 = vmatprep.subr.mxu0 0.0
    %1540 = vmatpush1.msra.mxu0 %v1525
    %1541 = vmatprep.subr.mxu0 0.0
    %1542 = vmatpush1.msra.mxu0 %v1526
    %1543 = vmatprep.subr.mxu0 0.0
    %1544 = vmatpush1.msra.mxu0 %v1527
    %1545 = vmatprep.subr.mxu0 0.0
    %1546 = vmatpush1.msra.mxu0 %v1528
    %1547 = vmatprep.subr.mxu0 0.0
    %1548 = vmatpush1.msra.mxu0 0.0
    %1549 = vmatprep.subr.mxu0 0.0
    %1550 = vmatpush1.msra.mxu0 0.0
    %1551 = vmatprep.subr.mxu0 0.0
    %1552 = vmatpush1.msra.mxu0 0.0
    %1553 = vmatprep.subr.mxu0 0.0
    %1554 = vmatpush1.msra.mxu0 0.0
    %1555 = vmatprep.subr.mxu0 0.0
    %1556 = vmatpush1.msra.mxu0 0.0
    %1557 = vmatprep.subr.mxu0 0.0
    %1558 = vmatpush1.msra.mxu0 0.0
    %1559 = vmatprep.subr.mxu0 0.0
    %1560 = vmatpush1.msra.mxu0 0.0
    %1561 = vmatprep.subr.mxu0 0.0
    %1562 = vmatpush1.msra.mxu0 0.0
    %1563 = vmatprep.subr.mxu0 0.0
    %1564 = vmatpush1.msra.mxu0 0.0
    %1565 = vmatprep.subr.mxu0 0.0
    %1566 = vmatpush1.msra.mxu0 0.0
    %1567 = vmatprep.subr.mxu0 0.0
    %1568 = vmatpush1.msra.mxu0 0.0
    %1569 = vmatprep.subr.mxu0 0.0
    %1570 = vmatpush1.msra.mxu0 0.0
    %1571 = vmatprep.subr.mxu0 0.0
    %1572 = vmatpush1.msra.mxu0 0.0
    %1573 = vmatprep.subr.mxu0 0.0
    %1574 = vmatpush1.msra.mxu0 0.0
    %1575 = vmatprep.subr.mxu0 0.0
    %1576 = vmatpush1.msra.mxu0 0.0
    %1577 = vmatprep.subr.mxu0 0.0
    %1578 = vmatpush1.msra.mxu0 0.0
    %1579 = vmatprep.subr.mxu0 0.0
    %1580 = vmatpush1.msra.mxu0 0.0
    %1581 = vmatprep.subr.mxu0 0.0
    %1582 = vmatpush1.msra.mxu0 0.0
    %1583 = vmatprep.subr.mxu0 0.0
    %1584 = vmatpush1.msra.mxu0 0.0
    %1585 = vmatprep.subr.mxu0 0.0
    %1586 = vmatpush1.msra.mxu0 0.0
    %1587 = vmatprep.subr.mxu0 0.0
    %1588 = vmatpush1.msra.mxu0 0.0
    %1589 = vmatprep.subr.mxu0 0.0
    %1590 = vmatpush1.msra.mxu0 0.0
    %1591 = vmatprep.subr.mxu0 0.0
    %1592 = vmatpush1.msra.mxu0 0.0
    %1593 = vmatprep.subr.mxu0 0.0
    %1594 = vmatpush1.msra.mxu0 0.0
    %1595 = vmatprep.subr.mxu0 0.0
    %1596 = vmatpush1.msra.mxu0 0.0
    %1597 = vmatprep.subr.mxu0 0.0
    %1598 = vmatpush1.msra.mxu0 0.0
    %1599 = vmatprep.subr.mxu0 0.0
    %1600 = vmatpush1.msra.mxu0 0.0
    %1601 = vmatprep.subr.mxu0 0.0
    %1602 = vmatpush1.msra.mxu0 0.0
    %1603 = vmatprep.mubr.f32.mxu0 0.0
    %1604 = vmatmul.mubr.f32.gmra.mrb[0].mxu0 %v1537
    %v1605 = vpop.f32.mrb[0].mxu0
    %v1606 = vadd.f32 %v1533, %v1605
    %v1607 = vpop.f32.mrb[0].mxu0
    %1608 = vdwg.mxu0
    %vm1609 = vcmask 64512
    %1610 = vst.msk [vmem:[#allocation3] sm:$0xff] %vm1609, %v1606
    // Predicated region
    $region26: #{tpu_custom_call.1} parent=1 // pred_check
      _
    $region27: #{tpu_custom_call.1} parent=1 // pred_check_branch
      %1612 = sbr.rel (0) target = $region29
    $region28: #{tpu_custom_call.1} parent=1 // pred_region
      %s1614 = ssub.s32 128, 128
      %1615 = vsyncadd [#allocation4], %s1614
      %s1617 = sshll.u32 [#allocation3], 4
      %s1618 = int_to_ptr.vmem [resolvable:$true] %s1617
      %1620 = dma.vmem_to_hbm [thread:$0]  %s1618, 128, %s6, [#allocation4]
    $region29: #{tpu_custom_call.1} parent=1 // pred_fallthru
      _
    // Predicated region
    $region30: #{tpu_custom_call.1} parent=1 // pred_check
      _
    $region31: #{tpu_custom_call.1} parent=1 // pred_check_branch
      %1622 = sbr.rel (0) target = $region33
    $region32: #{tpu_custom_call.1} parent=1 // pred_region
      %1623 = dma.done [#allocation4], 128
    $region33: #{tpu_custom_call.1} parent=1 // pred_fallthru
      _
    %1624 = vsyncpa [#allocation4], 1

</llo_original>
